<compile_context>
chip_gen: v5e
topology: v5e:2x2
jax: 0.10.0
libtpu: 0.0.40
codegen_flags: <defaults>
</compile_context>

<pallas_src>
import functools
import math

import jax
import jax.numpy as jnp
import numpy as np
from jax.experimental import pallas as pl
from jax.experimental.pallas import tpu as pltpu


def _round_up(x, m):
    return ((x + m - 1) // m) * m


# ----------------------------- mask creation --------------------------------
def create_masks_sequential(input_size, hidden_size, n_hidden):
    """numpy port of create_masks(..., input_order='sequential')."""
    assert input_size >= 2, "create_masks divides by (input_size - 1)"
    degrees = [np.arange(input_size)]
    for _ in range(n_hidden + 1):
        degrees.append(np.arange(hidden_size) % (input_size - 1))
    degrees.append(np.arange(input_size) % input_size - 1)
    masks = []
    for d0, d1 in zip(degrees[:-1], degrees[1:]):
        masks.append((d1[:, None] >= d0[None, :]).astype(np.float32))
    return masks, degrees[0]


# ------------------------------ Pallas kernel --------------------------------
def _made_kernel(n_hidden, dp, xy_ref, *refs):
    """refs layout: w01, b0, wh_0..wh_{n-1}, bh_0..bh_{n-1},
    wfm, bfm, wfa, bfa, out."""
    w01_ref, b0_ref = refs[0], refs[1]
    wh_refs = refs[2:2 + n_hidden]
    bh_refs = refs[2 + n_hidden:2 + 2 * n_hidden]
    wfm_ref, bfm_ref, wfa_ref, bfa_ref = refs[2 + 2 * n_hidden:6 + 2 * n_hidden]
    out_ref = refs[6 + 2 * n_hidden]

    xy32 = xy_ref[...]                                     # (tb, Kinp) f32

    # fused first layer: [x | y] @ [W0*M0 ; Wc] + b0  (bf16 operands, f32 acc)
    h = jnp.dot(xy32.astype(jnp.bfloat16), w01_ref[...],
                preferred_element_type=jnp.float32) + b0_ref[...]

    # hidden masked-linear stack (ReLU precedes each MaskedLinear)
    for k in range(n_hidden):
        h = jnp.maximum(h, 0.0).astype(jnp.bfloat16)
        h = jnp.dot(h, wh_refs[k][...],
                    preferred_element_type=jnp.float32) + bh_refs[k][...]

    # final layer split into m / loga halves (both lane-dense, width Dp)
    h = jnp.maximum(h, 0.0).astype(jnp.bfloat16)
    m = jnp.dot(h, wfm_ref[...],
                preferred_element_type=jnp.float32) + bfm_ref[...]
    loga = jnp.dot(h, wfa_ref[...],
                   preferred_element_type=jnp.float32) + bfa_ref[...]
    # TODO(synk): keep the loga matmul in f32 if exact parity with the f32
    # PyTorch weights (rather than the bf16-operand reference) is required.

    # f32 epilogue; columns >= D of x hold y / zeros and are sliced off in
    # the wrapper, so garbage there is irrelevant.
    x = xy32[:, :dp]
    out_ref[0] = (x - m) * jnp.exp(-loga)                  # u
    out_ref[1] = -loga                                     # log|det J|


# --------------------------------- wrapper -----------------------------------
def made_forward_pallas(x, y, params, *, n_hidden, tile_b=None):
    """MADE forward (u, log_abs_det_jacobian) via a Pallas TPU kernel."""
    D, C, H, Hp, Dp, Kinp = params["dims"]
    B = x.shape[0]
    Kin = D + C

    # ---- batch tiling --------------------------------------------------
    if tile_b is None:
        # >= 2 tiles once B >= 64 so both v7x TensorCores get work; tiles a
        # multiple of 16 (bf16 sublane packing); <= 512 rows/tile; sized from
        # B so the batch padding stays small (at most one sublane group).
        min_tiles = 2 if B >= 64 else 1
        n_tiles = max(pl.cdiv(B, 512), min_tiles)
        tile_b = min(512, _round_up(pl.cdiv(B, n_tiles), 16))
    tile_b = max(16, _round_up(tile_b, 16))
    Bp = _round_up(max(B, tile_b), tile_b)
    grid = (Bp // tile_b,)

    # ---- single fused input: f32 [x | y], batch + lane padded ------------
    xy = jnp.concatenate([x.astype(jnp.float32), y.astype(jnp.float32)],
                         axis=-1)
    xy = jnp.pad(xy, ((0, Bp - B), (0, Kinp - Kin)))       # (Bp, Kinp) f32

    w01, b0 = params["w01"], params["b0"]
    wh, bh = list(params["wh"]), list(params["bh"])
    wfm, bfm = params["wfm"], params["bfm"]
    wfa, bfa = params["wfa"], params["bfa"]
    weight_args = [w01, b0] + wh + bh + [wfm, bfm, wfa, bfa]

    weight_bytes = sum(int(a.size) * a.dtype.itemsize for a in weight_args)
    io_bytes = tile_b * Kinp * 4 + 2 * tile_b * Dp * 4     # per grid step
    act_bytes = 6 * tile_b * Hp * 4                        # live activations

    # generation-aware VMEM ceiling (v5e/v6e: 128 MiB, v7x: 64 MiB per core)
    try:
        vmem_cap = int(pltpu.get_tpu_info().vmem_capacity_bytes)
    except Exception:
        vmem_cap = 64 << 20
    vmem_ceiling = int(vmem_cap * 0.85)        # headroom for Mosaic scratch
    # TODO(synk): if weight_bytes alone exceeds vmem_ceiling (very large Hp),
    # stream the hidden weights per layer with pltpu.emit_pipeline instead of
    # keeping them all resident.

    flops = 2 * Bp * (Kinp * Hp + n_hidden * Hp * Hp + 2 * Hp * Dp)
    cost = pl.CostEstimate(
        flops=int(flops),
        transcendentals=int(Bp * Dp),
        bytes_accessed=int(Bp * Kinp * 4 + weight_bytes + 2 * Bp * Dp * 4))

    kernel = functools.partial(_made_kernel, n_hidden, Dp)
    out_shape = jax.ShapeDtypeStruct((2, Bp, Dp), jnp.float32)
    out_spec = pl.BlockSpec((2, tile_b, Dp), lambda i: (0, i, 0))
    xy_spec = pl.BlockSpec((tile_b, Kinp), lambda i: (i, 0))

    def run(single_buffer):
        def wspec(shape):
            idx = lambda i: (0,) * len(shape)
            if single_buffer:
                # constant index_map => block is revisited every grid step;
                # one buffer suffices and halves resident weight VMEM.
                return pl.BlockSpec(shape, idx, pipeline_mode=pl.Buffered(1))
            return pl.BlockSpec(shape, idx)

        in_specs = [xy_spec] + [wspec(a.shape) for a in weight_args]
        vmem_limit = int(min(
            max((1 if single_buffer else 2) * weight_bytes
                + 2 * io_bytes + act_bytes + (2 << 20), 16 << 20),
            vmem_ceiling))
        return pl.pallas_call(
            kernel,
            out_shape=out_shape,
            grid=grid,
            in_specs=in_specs,
            out_specs=out_spec,
            compiler_params=pltpu.CompilerParams(
                dimension_semantics=("parallel",),
                vmem_limit_bytes=vmem_limit),
            cost_estimate=cost,
        )(xy, *weight_args)

    try:
        out = run(single_buffer=True)
    except Exception:
        # fall back to default double-buffered specs if this JAX build
        # rejects pl.Buffered(1) — still correct, just more VMEM.
        out = run(single_buffer=False)

    # drop batch / lane padding in the wrapper (plain XLA)
    return out[0, :B, :D], out[1, :B, :D]


# -------------------------- parameter construction ---------------------------
def init_made_params(key, input_size, hidden_size, n_hidden, cond_label_size):
    """Deterministic init mirroring nn.Linear / MaskedLinear shapes.

    Returns pre-masked weights, transposed to (fan_in, fan_out), padded to
    128-lane multiples, conditioning weight fused into the first layer, and
    matmul operands cast to bf16 (biases stay f32).
    """
    D, H, C = input_size, hidden_size, cond_label_size
    Hp = _round_up(H, 128)
    Dp = _round_up(D, 128)
    Kin = D + C
    Kinp = _round_up(Kin, 128)

    masks, input_degrees = create_masks_sequential(D, H, n_hidden)

    def linear_init(key, fan_in, fan_out):
        kw, kb = jax.random.split(key)
        bound = 1.0 / math.sqrt(fan_in)
        w = jax.random.uniform(kw, (fan_out, fan_in), jnp.float32, -bound, bound)
        b = jax.random.uniform(kb, (fan_out,), jnp.float32, -bound, bound)
        return w, b

    keys = jax.random.split(key, n_hidden + 3)

    # net_input: MaskedLinear(D, H, masks[0], cond_label_size); cond fused in
    w0, b0 = linear_init(keys[0], D, H)
    m0 = jnp.asarray(masks[0])                                    # (H, D)
    cond_w = (jax.random.uniform(keys[1], (H, C), jnp.float32, 0.0, 1.0)
              / math.sqrt(C))                                     # torch.rand/sqrt(C)
    w01 = jnp.concatenate([(w0 * m0).T, cond_w.T], axis=0)        # (Kin, H)
    w01 = jnp.pad(w01, ((0, Kinp - Kin), (0, Hp - H)))            # (Kinp, Hp)
    b0p = jnp.pad(b0, (0, Hp - H))[None, :]                       # (1, Hp)

    # hidden stack: MaskedLinear(H, H, masks[k]) — separate arrays per layer
    wh_list, bh_list = [], []
    for k in range(n_hidden):
        wk, bk = linear_init(keys[2 + k], H, H)
        mk = jnp.asarray(masks[1 + k])                            # (H, H)
        wh_list.append(
            jnp.pad((wk * mk).T, ((0, Hp - H), (0, Hp - H))).astype(jnp.bfloat16))
        bh_list.append(jnp.pad(bk, (0, Hp - H))[None, :].astype(jnp.float32))

    # final: MaskedLinear(H, 2D, masks[-1].repeat(2, 1)), split into m / loga
    wf, bf = linear_init(keys[2 + n_hidden], H, 2 * D)
    mf = jnp.concatenate([jnp.asarray(masks[-1])] * 2, axis=0)    # (2D, H)
    wfm = jnp.pad((wf[:D] * mf[:D]).T, ((0, Hp - H), (0, Dp - D)))
    wfa = jnp.pad((wf[D:] * mf[D:]).T, ((0, Hp - H), (0, Dp - D)))
    bfm = jnp.pad(bf[:D], (0, Dp - D))[None, :]
    bfa = jnp.pad(bf[D:], (0, Dp - D))[None, :]

    params = {
        "w01": w01.astype(jnp.bfloat16),
        "b0": b0p,
        "wh": wh_list,
        "bh": bh_list,
        "wfm": wfm.astype(jnp.bfloat16),
        "bfm": bfm,
        "wfa": wfa.astype(jnp.bfloat16),
        "bfa": bfa,
        "dims": (D, C, H, Hp, Dp, Kinp),
    }
    return params, input_degrees


# ------------------------------ pure-JAX reference ---------------------------
def made_forward_ref(x, y, params, *, n_hidden):
    """Reference with the same numerics as the kernel (bf16 operands, f32
    accumulation, f32 epilogue)."""
    D, C, H, Hp, Dp, Kinp = params["dims"]
    x32 = x.astype(jnp.float32)
    xy = jnp.concatenate([x32, y.astype(jnp.float32)], axis=-1).astype(jnp.bfloat16)
    h = jnp.dot(xy, params["w01"][:D + C],
                preferred_element_type=jnp.float32) + params["b0"]
    for k in range(n_hidden):
        h = jnp.maximum(h, 0.0).astype(jnp.bfloat16)
        h = jnp.dot(h, params["wh"][k],
                    preferred_element_type=jnp.float32) + params["bh"][k]
    h = jnp.maximum(h, 0.0).astype(jnp.bfloat16)
    m = jnp.dot(h, params["wfm"], preferred_element_type=jnp.float32) + params["bfm"]
    loga = jnp.dot(h, params["wfa"], preferred_element_type=jnp.float32) + params["bfa"]
    m, loga = m[:, :D], loga[:, :D]
    u = (x32 - m) * jnp.exp(-loga)
    return u, -loga


# ----------------------------------- main ------------------------------------
if __name__ == "__main__":
    B = 16            # batch
    D = 8             # input_size
    H = 32            # hidden_size
    N_HIDDEN = 2      # n_hidden
    C = 4             # cond_label_size

    key = jax.random.PRNGKey(0)
    kx, ky, kp = jax.random.split(key, 3)
    x = jax.random.normal(kx, (B, D), jnp.float32)
    y = jax.random.normal(ky, (B, C), jnp.float32)

    params, _ = init_made_params(kp, D, H, N_HIDDEN, C)

    u, log_abs_det_jacobian = made_forward_pallas(x, y, params, n_hidden=N_HIDDEN)
    jax.block_until_ready((u, log_abs_det_jacobian))

    u_ref, lad_ref = made_forward_ref(x, y, params, n_hidden=N_HIDDEN)
    np.testing.assert_allclose(np.asarray(u), np.asarray(u_ref),
                               rtol=1e-4, atol=1e-4)
    np.testing.assert_allclose(np.asarray(log_abs_det_jacobian),
                               np.asarray(lad_ref), rtol=1e-4, atol=1e-4)

    print("KERNEL_OK")
</pallas_src>

<mosaic_0001>
module attributes {stable_mosaic.version = 11 : i64} {
  func.func @_made_kernel(%arg0: i32, %arg1: memref<16x128xf32, #tpu.memory_space<vmem>>, %arg2: memref<128x128xbf16, #tpu.memory_space<vmem>>, %arg3: memref<1x128xf32, #tpu.memory_space<vmem>>, %arg4: memref<128x128xbf16, #tpu.memory_space<vmem>>, %arg5: memref<128x128xbf16, #tpu.memory_space<vmem>>, %arg6: memref<1x128xf32, #tpu.memory_space<vmem>>, %arg7: memref<1x128xf32, #tpu.memory_space<vmem>>, %arg8: memref<128x128xbf16, #tpu.memory_space<vmem>>, %arg9: memref<1x128xf32, #tpu.memory_space<vmem>>, %arg10: memref<128x128xbf16, #tpu.memory_space<vmem>>, %arg11: memref<1x128xf32, #tpu.memory_space<vmem>>, %arg12: memref<2x16x128xf32, #tpu.memory_space<vmem>>) attributes {dimension_semantics = [#tpu.dimension_semantics<parallel>], iteration_bounds = array<i64: 1>, scalar_prefetch = 0 : i64, scratch_operands = 0 : i64, tpu.core_type = #tpu.core_type<tc>, window_params = [{transform_indices = @transform_0, window_bounds = array<i64: 16, 128>}, {pipeline_mode = #tpu.pipeline_mode<synchronous>, transform_indices = @transform_1, window_bounds = array<i64: 128, 128>}, {pipeline_mode = #tpu.pipeline_mode<synchronous>, transform_indices = @transform_2, window_bounds = array<i64: 1, 128>}, {pipeline_mode = #tpu.pipeline_mode<synchronous>, transform_indices = @transform_3, window_bounds = array<i64: 128, 128>}, {pipeline_mode = #tpu.pipeline_mode<synchronous>, transform_indices = @transform_4, window_bounds = array<i64: 128, 128>}, {pipeline_mode = #tpu.pipeline_mode<synchronous>, transform_indices = @transform_5, window_bounds = array<i64: 1, 128>}, {pipeline_mode = #tpu.pipeline_mode<synchronous>, transform_indices = @transform_6, window_bounds = array<i64: 1, 128>}, {pipeline_mode = #tpu.pipeline_mode<synchronous>, transform_indices = @transform_7, window_bounds = array<i64: 128, 128>}, {pipeline_mode = #tpu.pipeline_mode<synchronous>, transform_indices = @transform_8, window_bounds = array<i64: 1, 128>}, {pipeline_mode = #tpu.pipeline_mode<synchronous>, transform_indices = @transform_9, window_bounds = array<i64: 128, 128>}, {pipeline_mode = #tpu.pipeline_mode<synchronous>, transform_indices = @transform_10, window_bounds = array<i64: 1, 128>}, {transform_indices = @transform_11, window_bounds = array<i64: 2, 16, 128>}]} {
    %c0 = arith.constant 0 : index
    %c0_0 = arith.constant 0 : index
    %0 = vector.load %arg1[%c0, %c0_0] : memref<16x128xf32, #tpu.memory_space<vmem>>, vector<16x128xf32>
    %1 = arith.truncf %0 : vector<16x128xf32> to vector<16x128xbf16>
    %c0_1 = arith.constant 0 : index
    %c0_2 = arith.constant 0 : index
    %2 = vector.load %arg2[%c0_1, %c0_2] : memref<128x128xbf16, #tpu.memory_space<vmem>>, vector<128x128xbf16>
    %cst = arith.constant dense<0.000000e+00> : vector<16x128xf32>
    %3 = tpu.matmul %1, %2, %cst {dimension_numbers = #tpu.dot_dimension_numbers<[1], [0], [0], [1], [0, 0, 1, 1], [], []>} : vector<16x128xbf16>, vector<128x128xbf16>, vector<16x128xf32> -> vector<16x128xf32>
    %c0_3 = arith.constant 0 : index
    %c0_4 = arith.constant 0 : index
    %4 = vector.load %arg3[%c0_3, %c0_4] : memref<1x128xf32, #tpu.memory_space<vmem>>, vector<1x128xf32>
    %5 = vector.broadcast %4 : vector<1x128xf32> to vector<16x128xf32>
    %6 = arith.addf %3, %5 : vector<16x128xf32>
    %cst_5 = arith.constant 0.000000e+00 : f32
    %7 = vector.broadcast %cst_5 : f32 to vector<16x128xf32>
    %8 = arith.maximumf %6, %7 : vector<16x128xf32>
    %9 = arith.truncf %8 : vector<16x128xf32> to vector<16x128xbf16>
    %c0_6 = arith.constant 0 : index
    %c0_7 = arith.constant 0 : index
    %10 = vector.load %arg4[%c0_6, %c0_7] : memref<128x128xbf16, #tpu.memory_space<vmem>>, vector<128x128xbf16>
    %cst_8 = arith.constant dense<0.000000e+00> : vector<16x128xf32>
    %11 = tpu.matmul %9, %10, %cst_8 {dimension_numbers = #tpu.dot_dimension_numbers<[1], [0], [0], [1], [0, 0, 1, 1], [], []>} : vector<16x128xbf16>, vector<128x128xbf16>, vector<16x128xf32> -> vector<16x128xf32>
    %c0_9 = arith.constant 0 : index
    %c0_10 = arith.constant 0 : index
    %12 = vector.load %arg6[%c0_9, %c0_10] : memref<1x128xf32, #tpu.memory_space<vmem>>, vector<1x128xf32>
    %13 = vector.broadcast %12 : vector<1x128xf32> to vector<16x128xf32>
    %14 = arith.addf %11, %13 : vector<16x128xf32>
    %cst_11 = arith.constant 0.000000e+00 : f32
    %15 = vector.broadcast %cst_11 : f32 to vector<16x128xf32>
    %16 = arith.maximumf %14, %15 : vector<16x128xf32>
    %17 = arith.truncf %16 : vector<16x128xf32> to vector<16x128xbf16>
    %c0_12 = arith.constant 0 : index
    %c0_13 = arith.constant 0 : index
    %18 = vector.load %arg5[%c0_12, %c0_13] : memref<128x128xbf16, #tpu.memory_space<vmem>>, vector<128x128xbf16>
    %cst_14 = arith.constant dense<0.000000e+00> : vector<16x128xf32>
    %19 = tpu.matmul %17, %18, %cst_14 {dimension_numbers = #tpu.dot_dimension_numbers<[1], [0], [0], [1], [0, 0, 1, 1], [], []>} : vector<16x128xbf16>, vector<128x128xbf16>, vector<16x128xf32> -> vector<16x128xf32>
    %c0_15 = arith.constant 0 : index
    %c0_16 = arith.constant 0 : index
    %20 = vector.load %arg7[%c0_15, %c0_16] : memref<1x128xf32, #tpu.memory_space<vmem>>, vector<1x128xf32>
    %21 = vector.broadcast %20 : vector<1x128xf32> to vector<16x128xf32>
    %22 = arith.addf %19, %21 : vector<16x128xf32>
    %cst_17 = arith.constant 0.000000e+00 : f32
    %23 = vector.broadcast %cst_17 : f32 to vector<16x128xf32>
    %24 = arith.maximumf %22, %23 : vector<16x128xf32>
    %25 = arith.truncf %24 : vector<16x128xf32> to vector<16x128xbf16>
    %c0_18 = arith.constant 0 : index
    %c0_19 = arith.constant 0 : index
    %26 = vector.load %arg8[%c0_18, %c0_19] : memref<128x128xbf16, #tpu.memory_space<vmem>>, vector<128x128xbf16>
    %cst_20 = arith.constant dense<0.000000e+00> : vector<16x128xf32>
    %27 = tpu.matmul %25, %26, %cst_20 {dimension_numbers = #tpu.dot_dimension_numbers<[1], [0], [0], [1], [0, 0, 1, 1], [], []>} : vector<16x128xbf16>, vector<128x128xbf16>, vector<16x128xf32> -> vector<16x128xf32>
    %c0_21 = arith.constant 0 : index
    %c0_22 = arith.constant 0 : index
    %28 = vector.load %arg9[%c0_21, %c0_22] : memref<1x128xf32, #tpu.memory_space<vmem>>, vector<1x128xf32>
    %29 = vector.broadcast %28 : vector<1x128xf32> to vector<16x128xf32>
    %30 = arith.addf %27, %29 : vector<16x128xf32>
    %c0_23 = arith.constant 0 : index
    %c0_24 = arith.constant 0 : index
    %31 = vector.load %arg10[%c0_23, %c0_24] : memref<128x128xbf16, #tpu.memory_space<vmem>>, vector<128x128xbf16>
    %cst_25 = arith.constant dense<0.000000e+00> : vector<16x128xf32>
    %32 = tpu.matmul %25, %31, %cst_25 {dimension_numbers = #tpu.dot_dimension_numbers<[1], [0], [0], [1], [0, 0, 1, 1], [], []>} : vector<16x128xbf16>, vector<128x128xbf16>, vector<16x128xf32> -> vector<16x128xf32>
    %c0_26 = arith.constant 0 : index
    %c0_27 = arith.constant 0 : index
    %33 = vector.load %arg11[%c0_26, %c0_27] : memref<1x128xf32, #tpu.memory_space<vmem>>, vector<1x128xf32>
    %34 = vector.broadcast %33 : vector<1x128xf32> to vector<16x128xf32>
    %35 = arith.addf %32, %34 : vector<16x128xf32>
    %36 = arith.subf %0, %30 : vector<16x128xf32>
    %cst_28 = arith.constant 0.000000e+00 : f32
    %37 = vector.broadcast %cst_28 : f32 to vector<16x128xf32>
    %38 = arith.subf %37, %35 : vector<16x128xf32>
    %39 = math.exp %38 : vector<16x128xf32>
    %40 = arith.mulf %36, %39 : vector<16x128xf32>
    %c0_29 = arith.constant 0 : index
    %c0_30 = arith.constant 0 : index
    %c0_31 = arith.constant 0 : index
    %41 = vector.load %arg12[%c0_29, %c0_30, %c0_31] : memref<2x16x128xf32, #tpu.memory_space<vmem>>, vector<1x16x128xf32>
    %42 = vector.shape_cast %41 : vector<1x16x128xf32> to vector<16x128xf32>
    %43 = vector.shape_cast %40 : vector<16x128xf32> to vector<1x16x128xf32>
    tpu.vector_store %arg12[%c0_29, %c0_30, %c0_31], %43 {strides = array<i32>} : memref<2x16x128xf32, #tpu.memory_space<vmem>>, vector<1x16x128xf32>,
    %cst_32 = arith.constant 0.000000e+00 : f32
    %44 = vector.broadcast %cst_32 : f32 to vector<16x128xf32>
    %45 = arith.subf %44, %35 : vector<16x128xf32>
    %c1 = arith.constant 1 : index
    %c0_33 = arith.constant 0 : index
    %c0_34 = arith.constant 0 : index
    %46 = vector.load %arg12[%c1, %c0_33, %c0_34] : memref<2x16x128xf32, #tpu.memory_space<vmem>>, vector<1x16x128xf32>
    %47 = vector.shape_cast %46 : vector<1x16x128xf32> to vector<16x128xf32>
    %48 = vector.shape_cast %45 : vector<16x128xf32> to vector<1x16x128xf32>
    tpu.vector_store %arg12[%c1, %c0_33, %c0_34], %48 {strides = array<i32>} : memref<2x16x128xf32, #tpu.memory_space<vmem>>, vector<1x16x128xf32>,
    return
  }
  func.func @transform_0(%arg0: i32) -> (i32, i32) {
    %c0_i32 = arith.constant 0 : i32
    %c0_i32_0 = arith.constant 0 : i32
    return %arg0, %c0_i32 : i32, i32
  }
  func.func @transform_1(%arg0: i32) -> (i32, i32) {
    %c0_i32 = arith.constant 0 : i32
    %c0_i32_0 = arith.constant 0 : i32
    %c0_i32_1 = arith.constant 0 : i32
    return %c0_i32, %c0_i32_0 : i32, i32
  }
  func.func @transform_2(%arg0: i32) -> (i32, i32) {
    %c0_i32 = arith.constant 0 : i32
    %c0_i32_0 = arith.constant 0 : i32
    %c0_i32_1 = arith.constant 0 : i32
    return %c0_i32, %c0_i32_0 : i32, i32
  }
  func.func @transform_3(%arg0: i32) -> (i32, i32) {
    %c0_i32 = arith.constant 0 : i32
    %c0_i32_0 = arith.constant 0 : i32
    %c0_i32_1 = arith.constant 0 : i32
    return %c0_i32, %c0_i32_0 : i32, i32
  }
  func.func @transform_4(%arg0: i32) -> (i32, i32) {
    %c0_i32 = arith.constant 0 : i32
    %c0_i32_0 = arith.constant 0 : i32
    %c0_i32_1 = arith.constant 0 : i32
    return %c0_i32, %c0_i32_0 : i32, i32
  }
  func.func @transform_5(%arg0: i32) -> (i32, i32) {
    %c0_i32 = arith.constant 0 : i32
    %c0_i32_0 = arith.constant 0 : i32
    %c0_i32_1 = arith.constant 0 : i32
    return %c0_i32, %c0_i32_0 : i32, i32
  }
  func.func @transform_6(%arg0: i32) -> (i32, i32) {
    %c0_i32 = arith.constant 0 : i32
    %c0_i32_0 = arith.constant 0 : i32
    %c0_i32_1 = arith.constant 0 : i32
    return %c0_i32, %c0_i32_0 : i32, i32
  }
  func.func @transform_7(%arg0: i32) -> (i32, i32) {
    %c0_i32 = arith.constant 0 : i32
    %c0_i32_0 = arith.constant 0 : i32
    %c0_i32_1 = arith.constant 0 : i32
    return %c0_i32, %c0_i32_0 : i32, i32
  }
  func.func @transform_8(%arg0: i32) -> (i32, i32) {
    %c0_i32 = arith.constant 0 : i32
    %c0_i32_0 = arith.constant 0 : i32
    %c0_i32_1 = arith.constant 0 : i32
    return %c0_i32, %c0_i32_0 : i32, i32
  }
  func.func @transform_9(%arg0: i32) -> (i32, i32) {
    %c0_i32 = arith.constant 0 : i32
    %c0_i32_0 = arith.constant 0 : i32
    %c0_i32_1 = arith.constant 0 : i32
    return %c0_i32, %c0_i32_0 : i32, i32
  }
  func.func @transform_10(%arg0: i32) -> (i32, i32) {
    %c0_i32 = arith.constant 0 : i32
    %c0_i32_0 = arith.constant 0 : i32
    %c0_i32_1 = arith.constant 0 : i32
    return %c0_i32, %c0_i32_0 : i32, i32
  }
  func.func @transform_11(%arg0: i32) -> (i32, i32, i32) {
    %c0_i32 = arith.constant 0 : i32
    %c0_i32_0 = arith.constant 0 : i32
    %c0_i32_1 = arith.constant 0 : i32
    return %c0_i32, %arg0, %c0_i32_0 : i32, i32, i32
  }
}

module attributes {stable_mosaic.version = 11 : i64} {
  func.func @_made_kernel(%arg0: i32, %arg1: memref<16x128xf32, #tpu.memory_space<vmem>>, %arg2: memref<128x128xbf16, #tpu.memory_space<vmem>>, %arg3: memref<1x128xf32, #tpu.memory_space<vmem>>, %arg4: memref<128x128xbf16, #tpu.memory_space<vmem>>, %arg5: memref<128x128xbf16, #tpu.memory_space<vmem>>, %arg6: memref<1x128xf32, #tpu.memory_space<vmem>>, %arg7: memref<1x128xf32, #tpu.memory_space<vmem>>, %arg8: memref<128x128xbf16, #tpu.memory_space<vmem>>, %arg9: memref<1x128xf32, #tpu.memory_space<vmem>>, %arg10: memref<128x128xbf16, #tpu.memory_space<vmem>>, %arg11: memref<1x128xf32, #tpu.memory_space<vmem>>, %arg12: memref<2x16x128xf32, #tpu.memory_space<vmem>>) attributes {dimension_semantics = [#tpu.dimension_semantics<parallel>], iteration_bounds = array<i64: 1>, scalar_prefetch = 0 : i64, scratch_operands = 0 : i64, tpu.core_type = #tpu.core_type<tc>, window_params = [{transform_indices = @transform_0, window_bounds = array<i64: 16, 128>}, {pipeline_mode = #tpu.pipeline_mode<synchronous>, transform_indices = @transform_1, window_bounds = array<i64: 128, 128>}, {pipeline_mode = #tpu.pipeline_mode<synchronous>, transform_indices = @transform_2, window_bounds = array<i64: 1, 128>}, {pipeline_mode = #tpu.pipeline_mode<synchronous>, transform_indices = @transform_3, window_bounds = array<i64: 128, 128>}, {pipeline_mode = #tpu.pipeline_mode<synchronous>, transform_indices = @transform_4, window_bounds = array<i64: 128, 128>}, {pipeline_mode = #tpu.pipeline_mode<synchronous>, transform_indices = @transform_5, window_bounds = array<i64: 1, 128>}, {pipeline_mode = #tpu.pipeline_mode<synchronous>, transform_indices = @transform_6, window_bounds = array<i64: 1, 128>}, {pipeline_mode = #tpu.pipeline_mode<synchronous>, transform_indices = @transform_7, window_bounds = array<i64: 128, 128>}, {pipeline_mode = #tpu.pipeline_mode<synchronous>, transform_indices = @transform_8, window_bounds = array<i64: 1, 128>}, {pipeline_mode = #tpu.pipeline_mode<synchronous>, transform_indices = @transform_9, window_bounds = array<i64: 128, 128>}, {pipeline_mode = #tpu.pipeline_mode<synchronous>, transform_indices = @transform_10, window_bounds = array<i64: 1, 128>}, {transform_indices = @transform_11, window_bounds = array<i64: 2, 16, 128>}]} {
    %c0 = arith.constant 0 : index
    %c0_0 = arith.constant 0 : index
    %0 = vector.load %arg1[%c0, %c0_0] : memref<16x128xf32, #tpu.memory_space<vmem>>, vector<16x128xf32>
    %1 = arith.truncf %0 : vector<16x128xf32> to vector<16x128xbf16>
    %c0_1 = arith.constant 0 : index
    %c0_2 = arith.constant 0 : index
    %2 = vector.load %arg2[%c0_1, %c0_2] : memref<128x128xbf16, #tpu.memory_space<vmem>>, vector<128x128xbf16>
    %cst = arith.constant dense<0.000000e+00> : vector<16x128xf32>
    %3 = tpu.matmul %1, %2, %cst {dimension_numbers = #tpu.dot_dimension_numbers<[1], [0], [0], [1], [0, 0, 1, 1], [], []>} : vector<16x128xbf16>, vector<128x128xbf16>, vector<16x128xf32> -> vector<16x128xf32>
    %c0_3 = arith.constant 0 : index
    %c0_4 = arith.constant 0 : index
    %4 = vector.load %arg3[%c0_3, %c0_4] : memref<1x128xf32, #tpu.memory_space<vmem>>, vector<1x128xf32>
    %5 = vector.broadcast %4 : vector<1x128xf32> to vector<16x128xf32>
    %6 = arith.addf %3, %5 : vector<16x128xf32>
    %cst_5 = arith.constant 0.000000e+00 : f32
    %7 = vector.broadcast %cst_5 : f32 to vector<16x128xf32>
    %8 = arith.maximumf %6, %7 : vector<16x128xf32>
    %9 = arith.truncf %8 : vector<16x128xf32> to vector<16x128xbf16>
    %c0_6 = arith.constant 0 : index
    %c0_7 = arith.constant 0 : index
    %10 = vector.load %arg4[%c0_6, %c0_7] : memref<128x128xbf16, #tpu.memory_space<vmem>>, vector<128x128xbf16>
    %cst_8 = arith.constant dense<0.000000e+00> : vector<16x128xf32>
    %11 = tpu.matmul %9, %10, %cst_8 {dimension_numbers = #tpu.dot_dimension_numbers<[1], [0], [0], [1], [0, 0, 1, 1], [], []>} : vector<16x128xbf16>, vector<128x128xbf16>, vector<16x128xf32> -> vector<16x128xf32>
    %c0_9 = arith.constant 0 : index
    %c0_10 = arith.constant 0 : index
    %12 = vector.load %arg6[%c0_9, %c0_10] : memref<1x128xf32, #tpu.memory_space<vmem>>, vector<1x128xf32>
    %13 = vector.broadcast %12 : vector<1x128xf32> to vector<16x128xf32>
    %14 = arith.addf %11, %13 : vector<16x128xf32>
    %cst_11 = arith.constant 0.000000e+00 : f32
    %15 = vector.broadcast %cst_11 : f32 to vector<16x128xf32>
    %16 = arith.maximumf %14, %15 : vector<16x128xf32>
    %17 = arith.truncf %16 : vector<16x128xf32> to vector<16x128xbf16>
    %c0_12 = arith.constant 0 : index
    %c0_13 = arith.constant 0 : index
    %18 = vector.load %arg5[%c0_12, %c0_13] : memref<128x128xbf16, #tpu.memory_space<vmem>>, vector<128x128xbf16>
    %cst_14 = arith.constant dense<0.000000e+00> : vector<16x128xf32>
    %19 = tpu.matmul %17, %18, %cst_14 {dimension_numbers = #tpu.dot_dimension_numbers<[1], [0], [0], [1], [0, 0, 1, 1], [], []>} : vector<16x128xbf16>, vector<128x128xbf16>, vector<16x128xf32> -> vector<16x128xf32>
    %c0_15 = arith.constant 0 : index
    %c0_16 = arith.constant 0 : index
    %20 = vector.load %arg7[%c0_15, %c0_16] : memref<1x128xf32, #tpu.memory_space<vmem>>, vector<1x128xf32>
    %21 = vector.broadcast %20 : vector<1x128xf32> to vector<16x128xf32>
    %22 = arith.addf %19, %21 : vector<16x128xf32>
    %cst_17 = arith.constant 0.000000e+00 : f32
    %23 = vector.broadcast %cst_17 : f32 to vector<16x128xf32>
    %24 = arith.maximumf %22, %23 : vector<16x128xf32>
    %25 = arith.truncf %24 : vector<16x128xf32> to vector<16x128xbf16>
    %c0_18 = arith.constant 0 : index
    %c0_19 = arith.constant 0 : index
    %26 = vector.load %arg8[%c0_18, %c0_19] : memref<128x128xbf16, #tpu.memory_space<vmem>>, vector<128x128xbf16>
    %cst_20 = arith.constant dense<0.000000e+00> : vector<16x128xf32>
    %27 = tpu.matmul %25, %26, %cst_20 {dimension_numbers = #tpu.dot_dimension_numbers<[1], [0], [0], [1], [0, 0, 1, 1], [], []>} : vector<16x128xbf16>, vector<128x128xbf16>, vector<16x128xf32> -> vector<16x128xf32>
    %c0_21 = arith.constant 0 : index
    %c0_22 = arith.constant 0 : index
    %28 = vector.load %arg9[%c0_21, %c0_22] : memref<1x128xf32, #tpu.memory_space<vmem>>, vector<1x128xf32>
    %29 = vector.broadcast %28 : vector<1x128xf32> to vector<16x128xf32>
    %30 = arith.addf %27, %29 : vector<16x128xf32>
    %c0_23 = arith.constant 0 : index
    %c0_24 = arith.constant 0 : index
    %31 = vector.load %arg10[%c0_23, %c0_24] : memref<128x128xbf16, #tpu.memory_space<vmem>>, vector<128x128xbf16>
    %cst_25 = arith.constant dense<0.000000e+00> : vector<16x128xf32>
    %32 = tpu.matmul %25, %31, %cst_25 {dimension_numbers = #tpu.dot_dimension_numbers<[1], [0], [0], [1], [0, 0, 1, 1], [], []>} : vector<16x128xbf16>, vector<128x128xbf16>, vector<16x128xf32> -> vector<16x128xf32>
    %c0_26 = arith.constant 0 : index
    %c0_27 = arith.constant 0 : index
    %33 = vector.load %arg11[%c0_26, %c0_27] : memref<1x128xf32, #tpu.memory_space<vmem>>, vector<1x128xf32>
    %34 = vector.broadcast %33 : vector<1x128xf32> to vector<16x128xf32>
    %35 = arith.addf %32, %34 : vector<16x128xf32>
    %36 = arith.subf %0, %30 : vector<16x128xf32>
    %cst_28 = arith.constant 0.000000e+00 : f32
    %37 = vector.broadcast %cst_28 : f32 to vector<16x128xf32>
    %38 = arith.subf %37, %35 : vector<16x128xf32>
    %39 = math.exp %38 : vector<16x128xf32>
    %40 = arith.mulf %36, %39 : vector<16x128xf32>
    %c0_29 = arith.constant 0 : index
    %c0_30 = arith.constant 0 : index
    %c0_31 = arith.constant 0 : index
    %41 = vector.load %arg12[%c0_29, %c0_30, %c0_31] : memref<2x16x128xf32, #tpu.memory_space<vmem>>, vector<1x16x128xf32>
    %42 = vector.shape_cast %41 : vector<1x16x128xf32> to vector<16x128xf32>
    %43 = vector.shape_cast %40 : vector<16x128xf32> to vector<1x16x128xf32>
    tpu.vector_store %arg12[%c0_29, %c0_30, %c0_31], %43 {strides = array<i32>} : memref<2x16x128xf32, #tpu.memory_space<vmem>>, vector<1x16x128xf32>,
    %cst_32 = arith.constant 0.000000e+00 : f32
    %44 = vector.broadcast %cst_32 : f32 to vector<16x128xf32>
    %45 = arith.subf %44, %35 : vector<16x128xf32>
    %c1 = arith.constant 1 : index
    %c0_33 = arith.constant 0 : index
    %c0_34 = arith.constant 0 : index
    %46 = vector.load %arg12[%c1, %c0_33, %c0_34] : memref<2x16x128xf32, #tpu.memory_space<vmem>>, vector<1x16x128xf32>
    %47 = vector.shape_cast %46 : vector<1x16x128xf32> to vector<16x128xf32>
    %48 = vector.shape_cast %45 : vector<16x128xf32> to vector<1x16x128xf32>
    tpu.vector_store %arg12[%c1, %c0_33, %c0_34], %48 {strides = array<i32>} : memref<2x16x128xf32, #tpu.memory_space<vmem>>, vector<1x16x128xf32>,
    return
  }
  func.func @transform_0(%arg0: i32) -> (i32, i32) {
    %c0_i32 = arith.constant 0 : i32
    %c0_i32_0 = arith.constant 0 : i32
    return %arg0, %c0_i32 : i32, i32
  }
  func.func @transform_1(%arg0: i32) -> (i32, i32) {
    %c0_i32 = arith.constant 0 : i32
    %c0_i32_0 = arith.constant 0 : i32
    %c0_i32_1 = arith.constant 0 : i32
    return %c0_i32, %c0_i32_0 : i32, i32
  }
  func.func @transform_2(%arg0: i32) -> (i32, i32) {
    %c0_i32 = arith.constant 0 : i32
    %c0_i32_0 = arith.constant 0 : i32
    %c0_i32_1 = arith.constant 0 : i32
    return %c0_i32, %c0_i32_0 : i32, i32
  }
  func.func @transform_3(%arg0: i32) -> (i32, i32) {
    %c0_i32 = arith.constant 0 : i32
    %c0_i32_0 = arith.constant 0 : i32
    %c0_i32_1 = arith.constant 0 : i32
    return %c0_i32, %c0_i32_0 : i32, i32
  }
  func.func @transform_4(%arg0: i32) -> (i32, i32) {
    %c0_i32 = arith.constant 0 : i32
    %c0_i32_0 = arith.constant 0 : i32
    %c0_i32_1 = arith.constant 0 : i32
    return %c0_i32, %c0_i32_0 : i32, i32
  }
  func.func @transform_5(%arg0: i32) -> (i32, i32) {
    %c0_i32 = arith.constant 0 : i32
    %c0_i32_0 = arith.constant 0 : i32
    %c0_i32_1 = arith.constant 0 : i32
    return %c0_i32, %c0_i32_0 : i32, i32
  }
  func.func @transform_6(%arg0: i32) -> (i32, i32) {
    %c0_i32 = arith.constant 0 : i32
    %c0_i32_0 = arith.constant 0 : i32
    %c0_i32_1 = arith.constant 0 : i32
    return %c0_i32, %c0_i32_0 : i32, i32
  }
  func.func @transform_7(%arg0: i32) -> (i32, i32) {
    %c0_i32 = arith.constant 0 : i32
    %c0_i32_0 = arith.constant 0 : i32
    %c0_i32_1 = arith.constant 0 : i32
    return %c0_i32, %c0_i32_0 : i32, i32
  }
  func.func @transform_8(%arg0: i32) -> (i32, i32) {
    %c0_i32 = arith.constant 0 : i32
    %c0_i32_0 = arith.constant 0 : i32
    %c0_i32_1 = arith.constant 0 : i32
    return %c0_i32, %c0_i32_0 : i32, i32
  }
  func.func @transform_9(%arg0: i32) -> (i32, i32) {
    %c0_i32 = arith.constant 0 : i32
    %c0_i32_0 = arith.constant 0 : i32
    %c0_i32_1 = arith.constant 0 : i32
    return %c0_i32, %c0_i32_0 : i32, i32
  }
  func.func @transform_10(%arg0: i32) -> (i32, i32) {
    %c0_i32 = arith.constant 0 : i32
    %c0_i32_0 = arith.constant 0 : i32
    %c0_i32_1 = arith.constant 0 : i32
    return %c0_i32, %c0_i32_0 : i32, i32
  }
  func.func @transform_11(%arg0: i32) -> (i32, i32, i32) {
    %c0_i32 = arith.constant 0 : i32
    %c0_i32_0 = arith.constant 0 : i32
    %c0_i32_1 = arith.constant 0 : i32
    return %c0_i32, %arg0, %c0_i32_0 : i32, i32, i32
  }
}

</mosaic_0001>

<llo_original>
// kernel: tpu_custom_call.1
$region0: #{tpu_custom_call.1}
  #allocation0 [shape = 'u32[]', space=smem, size = 0x4, offset = 0x4, fixed_abs, tag = 'smem constant byte address 0x4 - core index']
  #allocation1 [shape = 'u32[72,128]{1,0:T(1,128)}', space=vmem, size = 0x9000, scoped, tag = 'internal scratch']
  %s0 = inlined_call_operand.hbm [shape: f32[16,128], index: 0, kind: input, shape index: {}]
  %s1 = inlined_call_operand.hbm [shape: bf16[128,128], index: 1, kind: input, shape index: {}]
  %s2 = inlined_call_operand.vmem [shape: f32[1,128], index: 2, kind: input, shape index: {}]
  %s3 = inlined_call_operand.hbm [shape: bf16[128,128], index: 3, kind: input, shape index: {}]
  %s4 = inlined_call_operand.hbm [shape: bf16[128,128], index: 4, kind: input, shape index: {}]
  %s5 = inlined_call_operand.vmem [shape: f32[1,128], index: 5, kind: input, shape index: {}]
  %s6 = inlined_call_operand.vmem [shape: f32[1,128], index: 6, kind: input, shape index: {}]
  %s7 = inlined_call_operand.hbm [shape: bf16[128,128], index: 7, kind: input, shape index: {}]
  %s8 = inlined_call_operand.vmem [shape: f32[1,128], index: 8, kind: input, shape index: {}]
  %s9 = inlined_call_operand.hbm [shape: bf16[128,128], index: 9, kind: input, shape index: {}]
  %s10 = inlined_call_operand.vmem [shape: f32[1,128], index: 10, kind: input, shape index: {}]
  %s11 = inlined_call_operand.hbm [shape: f32[2,16,128], index: 11, kind: output, shape index: {}]
  %s12 = sld [smem:[#allocation0]]
  $region78: #{tpu_custom_call.1} parent=0
    _
  %s14 = ssub.s32 1, %s12
  %s15 = scalar_select 0, %s14, %s12
  $region1: #{tpu_custom_call.1} parent=0
    #allocation2 [shape = 'u8[8192]{0}', space=vmem, size = 0x2000, scoped, tag = 'input window, operand 0, single buffered']
    #allocation3 [shape = 's32[1]{0}', space=sflag, size = 0x4, scoped, tag = 'scoped memory for tpu_custom_call.1']
    #allocation4 [shape = 's32[1]{0}', space=sflag, size = 0x4, scoped, tag = 'scoped memory for tpu_custom_call.1']
    #allocation5 [shape = 'u8[32768]{0}', space=vmem, size = 0x8000, scoped, tag = 'input window, operand 1, single buffered']
    #allocation6 [shape = 's32[1]{0}', space=sflag, size = 0x4, scoped, tag = 'scoped memory for tpu_custom_call.1']
    #allocation7 [shape = 'u8[32768]{0}', space=vmem, size = 0x8000, scoped, tag = 'input window, operand 3, single buffered']
    #allocation8 [shape = 'u8[32768]{0}', space=vmem, size = 0x8000, scoped, tag = 'input window, operand 4, single buffered']
    #allocation9 [shape = 's32[1]{0}', space=sflag, size = 0x4, scoped, tag = 'scoped memory for tpu_custom_call.1']
    #allocation10 [shape = 'u8[32768]{0}', space=vmem, size = 0x8000, scoped, tag = 'input window, operand 7, single buffered']
    #allocation11 [shape = 'u8[32768]{0}', space=vmem, size = 0x8000, scoped, tag = 'input window, operand 9, single buffered']
    #allocation12 [shape = 's32[1]{0}', space=sflag, size = 0x4, scoped, tag = 'scoped memory for tpu_custom_call.1']
    #allocation13 [shape = 'u8[16384]{0}', space=vmem, size = 0x4000, scoped, tag = 'output window, operand 0, single buffered']
    %16 = vsyncpa [#allocation3], 0
    %17 = vsyncpa [#allocation6], 0
    %18 = vsyncpa [#allocation9], 0
    %19 = vsyncpa [#allocation12], 0
    %20 = vsyncpa [#allocation4], 0
    // Predicated region
    $region2: #{tpu_custom_call.1} parent=1 // pred_check
      _
    $region3: #{tpu_custom_call.1} parent=1 // pred_check_branch
      %22 = sbr.rel (0) target = $region5
    $region4: #{tpu_custom_call.1} parent=1 // pred_region
      %24 = vsyncadd [#allocation3], 0
      %s25 = sshll.u32 %s0, 4
      %s26 = int_to_ptr.hbm [resolvable:$true] %s25
      %s27 = sshll.u32 [#allocation2], 4
      %s28 = int_to_ptr.vmem [resolvable:$true] %s27
      %33 = dma.hbm_to_vmem [thread:$0]  %s26, 256, %s28, [#allocation3], 128, 128, 8
    $region5: #{tpu_custom_call.1} parent=1 // pred_fallthru
      _
    // Predicated region
    $region6: #{tpu_custom_call.1} parent=1 // pred_check
      _
    $region7: #{tpu_custom_call.1} parent=1 // pred_check_branch
      %35 = sbr.rel (0) target = $region9
    $region8: #{tpu_custom_call.1} parent=1 // pred_region
      %37 = vsyncadd [#allocation6], 0
      %s38 = sshll.u32 %s1, 4
      %s39 = int_to_ptr.hbm [resolvable:$true] %s38
      %s40 = sshll.u32 [#allocation5], 4
      %s41 = int_to_ptr.vmem [resolvable:$true] %s40
      %46 = dma.hbm_to_vmem [thread:$0]  %s39, 1024, %s41, [#allocation6], 64, 64, 4
    $region9: #{tpu_custom_call.1} parent=1 // pred_fallthru
      _
    // Predicated region
    $region10: #{tpu_custom_call.1} parent=1 // pred_check
      _
    $region11: #{tpu_custom_call.1} parent=1 // pred_check_branch
      %48 = sbr.rel (0) target = $region13
    $region12: #{tpu_custom_call.1} parent=1 // pred_region
      _
    $region13: #{tpu_custom_call.1} parent=1 // pred_fallthru
      _
    // Predicated region
    $region14: #{tpu_custom_call.1} parent=1 // pred_check
      _
    $region15: #{tpu_custom_call.1} parent=1 // pred_check_branch
      %50 = sbr.rel (0) target = $region17
    $region16: #{tpu_custom_call.1} parent=1 // pred_region
      %52 = vsyncadd [#allocation6], 0
      %s53 = sshll.u32 %s3, 4
      %s54 = int_to_ptr.hbm [resolvable:$true] %s53
      %s55 = sshll.u32 [#allocation7], 4
      %s56 = int_to_ptr.vmem [resolvable:$true] %s55
      %61 = dma.hbm_to_vmem [thread:$0]  %s54, 1024, %s56, [#allocation6], 64, 64, 4
    $region17: #{tpu_custom_call.1} parent=1 // pred_fallthru
      _
    // Predicated region
    $region18: #{tpu_custom_call.1} parent=1 // pred_check
      _
    $region19: #{tpu_custom_call.1} parent=1 // pred_check_branch
      %63 = sbr.rel (0) target = $region21
    $region20: #{tpu_custom_call.1} parent=1 // pred_region
      %65 = vsyncadd [#allocation9], 0
      %s66 = sshll.u32 %s4, 4
      %s67 = int_to_ptr.hbm [resolvable:$true] %s66
      %s68 = sshll.u32 [#allocation8], 4
      %s69 = int_to_ptr.vmem [resolvable:$true] %s68
      %74 = dma.hbm_to_vmem [thread:$0]  %s67, 1024, %s69, [#allocation9], 64, 64, 4
    $region21: #{tpu_custom_call.1} parent=1 // pred_fallthru
      _
    // Predicated region
    $region22: #{tpu_custom_call.1} parent=1 // pred_check
      _
    $region23: #{tpu_custom_call.1} parent=1 // pred_check_branch
      %76 = sbr.rel (0) target = $region25
    $region24: #{tpu_custom_call.1} parent=1 // pred_region
      _
    $region25: #{tpu_custom_call.1} parent=1 // pred_fallthru
      _
    // Predicated region
    $region26: #{tpu_custom_call.1} parent=1 // pred_check
      _
    $region27: #{tpu_custom_call.1} parent=1 // pred_check_branch
      %78 = sbr.rel (0) target = $region29
    $region28: #{tpu_custom_call.1} parent=1 // pred_region
      _
    $region29: #{tpu_custom_call.1} parent=1 // pred_fallthru
      _
    // Predicated region
    $region30: #{tpu_custom_call.1} parent=1 // pred_check
      _
    $region31: #{tpu_custom_call.1} parent=1 // pred_check_branch
      %80 = sbr.rel (0) target = $region33
    $region32: #{tpu_custom_call.1} parent=1 // pred_region
      %82 = vsyncadd [#allocation9], 0
      %s83 = sshll.u32 %s7, 4
      %s84 = int_to_ptr.hbm [resolvable:$true] %s83
      %s85 = sshll.u32 [#allocation10], 4
      %s86 = int_to_ptr.vmem [resolvable:$true] %s85
      %91 = dma.hbm_to_vmem [thread:$0]  %s84, 1024, %s86, [#allocation9], 64, 64, 4
    $region33: #{tpu_custom_call.1} parent=1 // pred_fallthru
      _
    // Predicated region
    $region34: #{tpu_custom_call.1} parent=1 // pred_check
      _
    $region35: #{tpu_custom_call.1} parent=1 // pred_check_branch
      %93 = sbr.rel (0) target = $region37
    $region36: #{tpu_custom_call.1} parent=1 // pred_region
      _
    $region37: #{tpu_custom_call.1} parent=1 // pred_fallthru
      _
    // Predicated region
    $region38: #{tpu_custom_call.1} parent=1 // pred_check
      _
    $region39: #{tpu_custom_call.1} parent=1 // pred_check_branch
      %95 = sbr.rel (0) target = $region41
    $region40: #{tpu_custom_call.1} parent=1 // pred_region
      %97 = vsyncadd [#allocation12], 0
      %s98 = sshll.u32 %s9, 4
      %s99 = int_to_ptr.hbm [resolvable:$true] %s98
      %s100 = sshll.u32 [#allocation11], 4
      %s101 = int_to_ptr.vmem [resolvable:$true] %s100
      %106 = dma.hbm_to_vmem [thread:$0]  %s99, 1024, %s101, [#allocation12], 64, 64, 4
    $region41: #{tpu_custom_call.1} parent=1 // pred_fallthru
      _
    // Predicated region
    $region42: #{tpu_custom_call.1} parent=1 // pred_check
      _
    $region43: #{tpu_custom_call.1} parent=1 // pred_check_branch
      %108 = sbr.rel (0) target = $region45
    $region44: #{tpu_custom_call.1} parent=1 // pred_region
      _
    $region45: #{tpu_custom_call.1} parent=1 // pred_fallthru
      _
    // Predicated region
    $region46: #{tpu_custom_call.1} parent=1 // pred_check
      _
    $region47: #{tpu_custom_call.1} parent=1 // pred_check_branch
      %110 = sbr.rel (0) target = $region49
    $region48: #{tpu_custom_call.1} parent=1 // pred_region
      %112 = dma.done [#allocation3], 256
    $region49: #{tpu_custom_call.1} parent=1 // pred_fallthru
      _
    // Predicated region
    $region50: #{tpu_custom_call.1} parent=1 // pred_check
      _
    $region51: #{tpu_custom_call.1} parent=1 // pred_check_branch
      %114 = sbr.rel (0) target = $region53
    $region52: #{tpu_custom_call.1} parent=1 // pred_region
      %116 = dma.done [#allocation6], 1024
    $region53: #{tpu_custom_call.1} parent=1 // pred_fallthru
      _
    // Predicated region
    $region54: #{tpu_custom_call.1} parent=1 // pred_check
      _
    $region55: #{tpu_custom_call.1} parent=1 // pred_check_branch
      %118 = sbr.rel (0) target = $region57
    $region56: #{tpu_custom_call.1} parent=1 // pred_region
      %120 = dma.done [#allocation6], 1024
    $region57: #{tpu_custom_call.1} parent=1 // pred_fallthru
      _
    // Predicated region
    $region58: #{tpu_custom_call.1} parent=1 // pred_check
      _
    $region59: #{tpu_custom_call.1} parent=1 // pred_check_branch
      %122 = sbr.rel (0) target = $region61
    $region60: #{tpu_custom_call.1} parent=1 // pred_region
      %124 = dma.done [#allocation9], 1024
    $region61: #{tpu_custom_call.1} parent=1 // pred_fallthru
      _
    // Predicated region
    $region62: #{tpu_custom_call.1} parent=1 // pred_check
      _
    $region63: #{tpu_custom_call.1} parent=1 // pred_check_branch
      %126 = sbr.rel (0) target = $region65
    $region64: #{tpu_custom_call.1} parent=1 // pred_region
      %128 = dma.done [#allocation9], 1024
    $region65: #{tpu_custom_call.1} parent=1 // pred_fallthru
      _
    // Predicated region
    $region66: #{tpu_custom_call.1} parent=1 // pred_check
      _
    $region67: #{tpu_custom_call.1} parent=1 // pred_check_branch
      %130 = sbr.rel (0) target = $region69
    $region68: #{tpu_custom_call.1} parent=1 // pred_region
      %132 = dma.done [#allocation12], 1024
    $region69: #{tpu_custom_call.1} parent=1 // pred_fallthru
      _
    %v133 = vld [vmem:[#allocation2] sm:$0xff]
    %v134 = vld [vmem:[#allocation2 + $0x8] sm:$0xff]
    %v135 = vpack.c.bf16 %v134, %v133
    %v136 = vld [vmem:[#allocation5] sm:$0xf]
    %v137 = vld [vmem:[#allocation5 + $0x4] sm:$0xf]
    %v138 = vld [vmem:[#allocation5 + $0x8] sm:$0xf]
    %v139 = vld [vmem:[#allocation5 + $0xc] sm:$0xf]
    %v140 = vld [vmem:[#allocation5 + $0x10] sm:$0xf]
    %v141 = vld [vmem:[#allocation5 + $0x14] sm:$0xf]
    %v142 = vld [vmem:[#allocation5 + $0x18] sm:$0xf]
    %v143 = vld [vmem:[#allocation5 + $0x1c] sm:$0xf]
    %v144 = vld [vmem:[#allocation5 + $0x20] sm:$0xf]
    %v145 = vld [vmem:[#allocation5 + $0x24] sm:$0xf]
    %v146 = vld [vmem:[#allocation5 + $0x28] sm:$0xf]
    %v147 = vld [vmem:[#allocation5 + $0x2c] sm:$0xf]
    %v148 = vld [vmem:[#allocation5 + $0x30] sm:$0xf]
    %v149 = vld [vmem:[#allocation5 + $0x34] sm:$0xf]
    %v150 = vld [vmem:[#allocation5 + $0x38] sm:$0xf]
    %v151 = vld [vmem:[#allocation5 + $0x3c] sm:$0xf]
    %v152 = vld [vmem:[%s2] sm:$0x1]
    %v154 = vperm.slane %v152, 0
    %v172 = vunpack.c.l.b16 %v136
    %v173 = vunpack.c.l.b16 %v137
    %v174 = vunpack.c.l.b16 %v138
    %v175 = vunpack.c.l.b16 %v139
    %v176 = vunpack.c.l.b16 %v140
    %v177 = vunpack.c.l.b16 %v141
    %v178 = vunpack.c.l.b16 %v142
    %v179 = vunpack.c.l.b16 %v143
    %v180 = vunpack.c.l.b16 %v144
    %v181 = vunpack.c.l.b16 %v145
    %v182 = vunpack.c.l.b16 %v146
    %v183 = vunpack.c.l.b16 %v147
    %v184 = vunpack.c.l.b16 %v148
    %v185 = vunpack.c.l.b16 %v149
    %v186 = vunpack.c.l.b16 %v150
    %v187 = vunpack.c.l.b16 %v151
    %v188 = vpack.c.b16 %v173, %v172
    %v189 = vpack.c.b16 %v175, %v174
    %v190 = vpack.c.b16 %v177, %v176
    %v191 = vpack.c.b16 %v179, %v178
    %v192 = vpack.c.b16 %v181, %v180
    %v193 = vpack.c.b16 %v183, %v182
    %v194 = vpack.c.b16 %v185, %v184
    %v195 = vpack.c.b16 %v187, %v186
    %204 = vmatpush.bf16.msra.mxu0 %v195
    %205 = vmatpush.bf16.msra.mxu0 %v194
    %206 = vmatpush.bf16.msra.mxu0 %v193
    %207 = vmatpush.bf16.msra.mxu0 %v192
    %208 = vmatpush.bf16.msra.mxu0 %v191
    %209 = vmatpush.bf16.msra.mxu0 %v190
    %210 = vmatpush.bf16.msra.mxu0 %v189
    %211 = vmatpush.bf16.msra.mxu0 %v188
    %212 = vmatmul.bf16.gmra.mxu0 %v135
    %v213 = vpop.f32.mrf.mxu0
    %v214 = vadd.f32 %v154, %v213
    %v215 = vpop.f32.mrf.mxu0
    %v216 = vadd.f32 %v154, %v215
    %217 = vdwg.mxu0
    %v218 = vmax.f32 %v214, 0.0
    %v219 = vmax.f32 %v216, 0.0
    %v220 = vpack.c.bf16 %v219, %v218
    %v221 = vld [vmem:[#allocation7] sm:$0xf]
    %v222 = vld [vmem:[#allocation7 + $0x4] sm:$0xf]
    %v223 = vld [vmem:[#allocation7 + $0x8] sm:$0xf]
    %v224 = vld [vmem:[#allocation7 + $0xc] sm:$0xf]
    %v225 = vld [vmem:[#allocation7 + $0x10] sm:$0xf]
    %v226 = vld [vmem:[#allocation7 + $0x14] sm:$0xf]
    %v227 = vld [vmem:[#allocation7 + $0x18] sm:$0xf]
    %v228 = vld [vmem:[#allocation7 + $0x1c] sm:$0xf]
    %v229 = vld [vmem:[#allocation7 + $0x20] sm:$0xf]
    %v230 = vld [vmem:[#allocation7 + $0x24] sm:$0xf]
    %v231 = vld [vmem:[#allocation7 + $0x28] sm:$0xf]
    %v232 = vld [vmem:[#allocation7 + $0x2c] sm:$0xf]
    %v233 = vld [vmem:[#allocation7 + $0x30] sm:$0xf]
    %v234 = vld [vmem:[#allocation7 + $0x34] sm:$0xf]
    %v235 = vld [vmem:[#allocation7 + $0x38] sm:$0xf]
    %v236 = vld [vmem:[#allocation7 + $0x3c] sm:$0xf]
    %v237 = vld [vmem:[%s5] sm:$0x1]
    %v239 = vperm.slane %v237, 0
    %v257 = vunpack.c.l.b16 %v221
    %v258 = vunpack.c.l.b16 %v222
    %v259 = vunpack.c.l.b16 %v223
    %v260 = vunpack.c.l.b16 %v224
    %v261 = vunpack.c.l.b16 %v225
    %v262 = vunpack.c.l.b16 %v226
    %v263 = vunpack.c.l.b16 %v227
    %v264 = vunpack.c.l.b16 %v228
    %v265 = vunpack.c.l.b16 %v229
    %v266 = vunpack.c.l.b16 %v230
    %v267 = vunpack.c.l.b16 %v231
    %v268 = vunpack.c.l.b16 %v232
    %v269 = vunpack.c.l.b16 %v233
    %v270 = vunpack.c.l.b16 %v234
    %v271 = vunpack.c.l.b16 %v235
    %v272 = vunpack.c.l.b16 %v236
    %v273 = vpack.c.b16 %v258, %v257
    %v274 = vpack.c.b16 %v260, %v259
    %v275 = vpack.c.b16 %v262, %v261
    %v276 = vpack.c.b16 %v264, %v263
    %v277 = vpack.c.b16 %v266, %v265
    %v278 = vpack.c.b16 %v268, %v267
    %v279 = vpack.c.b16 %v270, %v269
    %v280 = vpack.c.b16 %v272, %v271
    %289 = vmatpush.bf16.msra.mxu0 %v280
    %290 = vmatpush.bf16.msra.mxu0 %v279
    %291 = vmatpush.bf16.msra.mxu0 %v278
    %292 = vmatpush.bf16.msra.mxu0 %v277
    %293 = vmatpush.bf16.msra.mxu0 %v276
    %294 = vmatpush.bf16.msra.mxu0 %v275
    %295 = vmatpush.bf16.msra.mxu0 %v274
    %296 = vmatpush.bf16.msra.mxu0 %v273
    %297 = vmatmul.bf16.gmra.mxu0 %v220
    %v298 = vpop.f32.mrf.mxu0
    %v299 = vadd.f32 %v239, %v298
    %v300 = vpop.f32.mrf.mxu0
    %v301 = vadd.f32 %v239, %v300
    %302 = vdwg.mxu0
    %v303 = vmax.f32 %v299, 0.0
    %v304 = vmax.f32 %v301, 0.0
    %v305 = vpack.c.bf16 %v304, %v303
    %v306 = vld [vmem:[#allocation8] sm:$0xf]
    %v307 = vld [vmem:[#allocation8 + $0x4] sm:$0xf]
    %v308 = vld [vmem:[#allocation8 + $0x8] sm:$0xf]
    %v309 = vld [vmem:[#allocation8 + $0xc] sm:$0xf]
    %v310 = vld [vmem:[#allocation8 + $0x10] sm:$0xf]
    %v311 = vld [vmem:[#allocation8 + $0x14] sm:$0xf]
    %v312 = vld [vmem:[#allocation8 + $0x18] sm:$0xf]
    %v313 = vld [vmem:[#allocation8 + $0x1c] sm:$0xf]
    %v314 = vld [vmem:[#allocation8 + $0x20] sm:$0xf]
    %v315 = vld [vmem:[#allocation8 + $0x24] sm:$0xf]
    %v316 = vld [vmem:[#allocation8 + $0x28] sm:$0xf]
    %v317 = vld [vmem:[#allocation8 + $0x2c] sm:$0xf]
    %v318 = vld [vmem:[#allocation8 + $0x30] sm:$0xf]
    %v319 = vld [vmem:[#allocation8 + $0x34] sm:$0xf]
    %v320 = vld [vmem:[#allocation8 + $0x38] sm:$0xf]
    %v321 = vld [vmem:[#allocation8 + $0x3c] sm:$0xf]
    %v322 = vld [vmem:[%s6] sm:$0x1]
    %v324 = vperm.slane %v322, 0
    %v342 = vunpack.c.l.b16 %v306
    %v343 = vunpack.c.l.b16 %v307
    %v344 = vunpack.c.l.b16 %v308
    %v345 = vunpack.c.l.b16 %v309
    %v346 = vunpack.c.l.b16 %v310
    %v347 = vunpack.c.l.b16 %v311
    %v348 = vunpack.c.l.b16 %v312
    %v349 = vunpack.c.l.b16 %v313
    %v350 = vunpack.c.l.b16 %v314
    %v351 = vunpack.c.l.b16 %v315
    %v352 = vunpack.c.l.b16 %v316
    %v353 = vunpack.c.l.b16 %v317
    %v354 = vunpack.c.l.b16 %v318
    %v355 = vunpack.c.l.b16 %v319
    %v356 = vunpack.c.l.b16 %v320
    %v357 = vunpack.c.l.b16 %v321
    %v358 = vpack.c.b16 %v343, %v342
    %v359 = vpack.c.b16 %v345, %v344
    %v360 = vpack.c.b16 %v347, %v346
    %v361 = vpack.c.b16 %v349, %v348
    %v362 = vpack.c.b16 %v351, %v350
    %v363 = vpack.c.b16 %v353, %v352
    %v364 = vpack.c.b16 %v355, %v354
    %v365 = vpack.c.b16 %v357, %v356
    %374 = vmatpush.bf16.msra.mxu0 %v365
    %375 = vmatpush.bf16.msra.mxu0 %v364
    %376 = vmatpush.bf16.msra.mxu0 %v363
    %377 = vmatpush.bf16.msra.mxu0 %v362
    %378 = vmatpush.bf16.msra.mxu0 %v361
    %379 = vmatpush.bf16.msra.mxu0 %v360
    %380 = vmatpush.bf16.msra.mxu0 %v359
    %381 = vmatpush.bf16.msra.mxu0 %v358
    %382 = vmatmul.bf16.gmra.mxu0 %v305
    %v383 = vpop.f32.mrf.mxu0
    %v384 = vadd.f32 %v324, %v383
    %v385 = vpop.f32.mrf.mxu0
    %v386 = vadd.f32 %v324, %v385
    %387 = vdwg.mxu0
    %v388 = vmax.f32 %v384, 0.0
    %v389 = vmax.f32 %v386, 0.0
    %v390 = vpack.c.bf16 %v389, %v388
    %v391 = vld [vmem:[#allocation10] sm:$0xf]
    %v392 = vld [vmem:[#allocation10 + $0x4] sm:$0xf]
    %v393 = vld [vmem:[#allocation10 + $0x8] sm:$0xf]
    %v394 = vld [vmem:[#allocation10 + $0xc] sm:$0xf]
    %v395 = vld [vmem:[#allocation10 + $0x10] sm:$0xf]
    %v396 = vld [vmem:[#allocation10 + $0x14] sm:$0xf]
    %v397 = vld [vmem:[#allocation10 + $0x18] sm:$0xf]
    %v398 = vld [vmem:[#allocation10 + $0x1c] sm:$0xf]
    %v399 = vld [vmem:[#allocation10 + $0x20] sm:$0xf]
    %v400 = vld [vmem:[#allocation10 + $0x24] sm:$0xf]
    %v401 = vld [vmem:[#allocation10 + $0x28] sm:$0xf]
    %v402 = vld [vmem:[#allocation10 + $0x2c] sm:$0xf]
    %v403 = vld [vmem:[#allocation10 + $0x30] sm:$0xf]
    %v404 = vld [vmem:[#allocation10 + $0x34] sm:$0xf]
    %v405 = vld [vmem:[#allocation10 + $0x38] sm:$0xf]
    %v406 = vld [vmem:[#allocation10 + $0x3c] sm:$0xf]
    %v407 = vld [vmem:[%s8] sm:$0x1]
    %v409 = vperm.slane %v407, 0
    %v427 = vunpack.c.l.b16 %v391
    %v428 = vunpack.c.l.b16 %v392
    %v429 = vunpack.c.l.b16 %v393
    %v430 = vunpack.c.l.b16 %v394
    %v431 = vunpack.c.l.b16 %v395
    %v432 = vunpack.c.l.b16 %v396
    %v433 = vunpack.c.l.b16 %v397
    %v434 = vunpack.c.l.b16 %v398
    %v435 = vunpack.c.l.b16 %v399
    %v436 = vunpack.c.l.b16 %v400
    %v437 = vunpack.c.l.b16 %v401
    %v438 = vunpack.c.l.b16 %v402
    %v439 = vunpack.c.l.b16 %v403
    %v440 = vunpack.c.l.b16 %v404
    %v441 = vunpack.c.l.b16 %v405
    %v442 = vunpack.c.l.b16 %v406
    %v443 = vpack.c.b16 %v428, %v427
    %v444 = vpack.c.b16 %v430, %v429
    %v445 = vpack.c.b16 %v432, %v431
    %v446 = vpack.c.b16 %v434, %v433
    %v447 = vpack.c.b16 %v436, %v435
    %v448 = vpack.c.b16 %v438, %v437
    %v449 = vpack.c.b16 %v440, %v439
    %v450 = vpack.c.b16 %v442, %v441
    %459 = vmatpush.bf16.msra.mxu0 %v450
    %460 = vmatpush.bf16.msra.mxu0 %v449
    %461 = vmatpush.bf16.msra.mxu0 %v448
    %462 = vmatpush.bf16.msra.mxu0 %v447
    %463 = vmatpush.bf16.msra.mxu0 %v446
    %464 = vmatpush.bf16.msra.mxu0 %v445
    %465 = vmatpush.bf16.msra.mxu0 %v444
    %466 = vmatpush.bf16.msra.mxu0 %v443
    %467 = vmatmul.bf16.gmra.mxu0 %v390
    %v468 = vpop.f32.mrf.mxu0
    %v469 = vadd.f32 %v409, %v468
    %v470 = vpop.f32.mrf.mxu0
    %v471 = vadd.f32 %v409, %v470
    %472 = vdwg.mxu0
    %v473 = vld [vmem:[#allocation11] sm:$0xf]
    %v474 = vld [vmem:[#allocation11 + $0x4] sm:$0xf]
    %v475 = vld [vmem:[#allocation11 + $0x8] sm:$0xf]
    %v476 = vld [vmem:[#allocation11 + $0xc] sm:$0xf]
    %v477 = vld [vmem:[#allocation11 + $0x10] sm:$0xf]
    %v478 = vld [vmem:[#allocation11 + $0x14] sm:$0xf]
    %v479 = vld [vmem:[#allocation11 + $0x18] sm:$0xf]
    %v480 = vld [vmem:[#allocation11 + $0x1c] sm:$0xf]
    %v481 = vld [vmem:[#allocation11 + $0x20] sm:$0xf]
    %v482 = vld [vmem:[#allocation11 + $0x24] sm:$0xf]
    %v483 = vld [vmem:[#allocation11 + $0x28] sm:$0xf]
    %v484 = vld [vmem:[#allocation11 + $0x2c] sm:$0xf]
    %v485 = vld [vmem:[#allocation11 + $0x30] sm:$0xf]
    %v486 = vld [vmem:[#allocation11 + $0x34] sm:$0xf]
    %v487 = vld [vmem:[#allocation11 + $0x38] sm:$0xf]
    %v488 = vld [vmem:[#allocation11 + $0x3c] sm:$0xf]
    %v489 = vld [vmem:[%s10] sm:$0x1]
    %v491 = vperm.slane %v489, 0
    %v509 = vunpack.c.l.b16 %v473
    %v510 = vunpack.c.l.b16 %v474
    %v511 = vunpack.c.l.b16 %v475
    %v512 = vunpack.c.l.b16 %v476
    %v513 = vunpack.c.l.b16 %v477
    %v514 = vunpack.c.l.b16 %v478
    %v515 = vunpack.c.l.b16 %v479
    %v516 = vunpack.c.l.b16 %v480
    %v517 = vunpack.c.l.b16 %v481
    %v518 = vunpack.c.l.b16 %v482
    %v519 = vunpack.c.l.b16 %v483
    %v520 = vunpack.c.l.b16 %v484
    %v521 = vunpack.c.l.b16 %v485
    %v522 = vunpack.c.l.b16 %v486
    %v523 = vunpack.c.l.b16 %v487
    %v524 = vunpack.c.l.b16 %v488
    %v525 = vpack.c.b16 %v510, %v509
    %v526 = vpack.c.b16 %v512, %v511
    %v527 = vpack.c.b16 %v514, %v513
    %v528 = vpack.c.b16 %v516, %v515
    %v529 = vpack.c.b16 %v518, %v517
    %v530 = vpack.c.b16 %v520, %v519
    %v531 = vpack.c.b16 %v522, %v521
    %v532 = vpack.c.b16 %v524, %v523
    %541 = vmatpush.bf16.msra.mxu0 %v532
    %542 = vmatpush.bf16.msra.mxu0 %v531
    %543 = vmatpush.bf16.msra.mxu0 %v530
    %544 = vmatpush.bf16.msra.mxu0 %v529
    %545 = vmatpush.bf16.msra.mxu0 %v528
    %546 = vmatpush.bf16.msra.mxu0 %v527
    %547 = vmatpush.bf16.msra.mxu0 %v526
    %548 = vmatpush.bf16.msra.mxu0 %v525
    %549 = vmatmul.bf16.gmra.mxu0 %v390
    %v550 = vpop.f32.mrf.mxu0
    %v551 = vadd.f32 %v491, %v550
    %v552 = vpop.f32.mrf.mxu0
    %v553 = vadd.f32 %v491, %v552
    %554 = vdwg.mxu0
    %v555 = vsub.f32 %v133, %v469
    %v556 = vsub.f32 %v134, %v471
    %v557 = vsub.f32 0.0, %v551
    %v558 = vsub.f32 0.0, %v553
    %v559 = vmul.f32 %v557, 1.442695
    %v560 = vpow.pop %v559
    %v561 = vmul.f32 %v558, 1.442695
    %v562 = vpow.pop %v561
    %v563 = vmul.f32 %v555, %v560
    %v564 = vmul.f32 %v556, %v562
    %565 = vst [vmem:[#allocation13] sm:$0xff] %v563
    %566 = vst [vmem:[#allocation13 + $0x8] sm:$0xff] %v564
    %s567 = scalar_lea.vmem [#allocation13], 16
    %568 = vst [vmem:[%s567] sm:$0xff] %v557
    %569 = vst [vmem:[%s567 + $0x8] sm:$0xff] %v558
    // Predicated region
    $region70: #{tpu_custom_call.1} parent=1 // pred_check
      _
    $region71: #{tpu_custom_call.1} parent=1 // pred_check_branch
      %571 = sbr.rel (0) target = $region73
    $region72: #{tpu_custom_call.1} parent=1 // pred_region
      %573 = vsyncadd [#allocation4], 0
      %s574 = sshll.u32 [#allocation13], 4
      %s575 = int_to_ptr.vmem [resolvable:$true] %s574
      %s576 = sshll.u32 %s11, 4
      %s577 = int_to_ptr.hbm [resolvable:$true] %s576
      %582 = dma.vmem_to_hbm [thread:$0]  %s575, 512, %s577, [#allocation4], 128, 128, 8
    $region73: #{tpu_custom_call.1} parent=1 // pred_fallthru
      _
    // Predicated region
    $region74: #{tpu_custom_call.1} parent=1 // pred_check
      _
    $region75: #{tpu_custom_call.1} parent=1 // pred_check_branch
      %584 = sbr.rel (0) target = $region77
    $region76: #{tpu_custom_call.1} parent=1 // pred_region
      %586 = dma.done [#allocation4], 512
    $region77: #{tpu_custom_call.1} parent=1 // pred_fallthru
      _
    %587 = vsyncpa [#allocation3], 1
    %588 = vsyncpa [#allocation6], 1
    %589 = vsyncpa [#allocation9], 1
    %590 = vsyncpa [#allocation12], 1
    %591 = vsyncpa [#allocation4], 1

// kernel: tpu_custom_call.1
$region0: #{tpu_custom_call.1}
  #allocation0 [shape = 'u32[]', space=smem, size = 0x4, offset = 0x4, fixed_abs, tag = 'smem constant byte address 0x4 - core index']
  #allocation1 [shape = 'u32[72,128]{1,0:T(1,128)}', space=vmem, size = 0x9000, scoped, tag = 'internal scratch']
  %s0 = inlined_call_operand.hbm [shape: f32[16,128], index: 0, kind: input, shape index: {}]
  %s1 = inlined_call_operand.hbm [shape: bf16[128,128], index: 1, kind: input, shape index: {}]
  %s2 = inlined_call_operand.vmem [shape: f32[1,128], index: 2, kind: input, shape index: {}]
  %s3 = inlined_call_operand.hbm [shape: bf16[128,128], index: 3, kind: input, shape index: {}]
  %s4 = inlined_call_operand.hbm [shape: bf16[128,128], index: 4, kind: input, shape index: {}]
  %s5 = inlined_call_operand.vmem [shape: f32[1,128], index: 5, kind: input, shape index: {}]
  %s6 = inlined_call_operand.vmem [shape: f32[1,128], index: 6, kind: input, shape index: {}]
  %s7 = inlined_call_operand.hbm [shape: bf16[128,128], index: 7, kind: input, shape index: {}]
  %s8 = inlined_call_operand.vmem [shape: f32[1,128], index: 8, kind: input, shape index: {}]
  %s9 = inlined_call_operand.hbm [shape: bf16[128,128], index: 9, kind: input, shape index: {}]
  %s10 = inlined_call_operand.vmem [shape: f32[1,128], index: 10, kind: input, shape index: {}]
  %s11 = inlined_call_operand.hbm [shape: f32[2,16,128], index: 11, kind: output, shape index: {}]
  %s12 = sld [smem:[#allocation0]]
  $region78: #{tpu_custom_call.1} parent=0
    _
  %s14 = ssub.s32 1, %s12
  %s15 = scalar_select 0, %s14, %s12
  $region1: #{tpu_custom_call.1} parent=0
    #allocation2 [shape = 'u8[8192]{0}', space=vmem, size = 0x2000, scoped, tag = 'input window, operand 0, single buffered']
    #allocation3 [shape = 's32[1]{0}', space=sflag, size = 0x4, scoped, tag = 'scoped memory for tpu_custom_call.1']
    #allocation4 [shape = 's32[1]{0}', space=sflag, size = 0x4, scoped, tag = 'scoped memory for tpu_custom_call.1']
    #allocation5 [shape = 'u8[32768]{0}', space=vmem, size = 0x8000, scoped, tag = 'input window, operand 1, single buffered']
    #allocation6 [shape = 's32[1]{0}', space=sflag, size = 0x4, scoped, tag = 'scoped memory for tpu_custom_call.1']
    #allocation7 [shape = 'u8[32768]{0}', space=vmem, size = 0x8000, scoped, tag = 'input window, operand 3, single buffered']
    #allocation8 [shape = 'u8[32768]{0}', space=vmem, size = 0x8000, scoped, tag = 'input window, operand 4, single buffered']
    #allocation9 [shape = 's32[1]{0}', space=sflag, size = 0x4, scoped, tag = 'scoped memory for tpu_custom_call.1']
    #allocation10 [shape = 'u8[32768]{0}', space=vmem, size = 0x8000, scoped, tag = 'input window, operand 7, single buffered']
    #allocation11 [shape = 'u8[32768]{0}', space=vmem, size = 0x8000, scoped, tag = 'input window, operand 9, single buffered']
    #allocation12 [shape = 's32[1]{0}', space=sflag, size = 0x4, scoped, tag = 'scoped memory for tpu_custom_call.1']
    #allocation13 [shape = 'u8[16384]{0}', space=vmem, size = 0x4000, scoped, tag = 'output window, operand 0, single buffered']
    %16 = vsyncpa [#allocation3], 0
    %17 = vsyncpa [#allocation6], 0
    %18 = vsyncpa [#allocation9], 0
    %19 = vsyncpa [#allocation12], 0
    %20 = vsyncpa [#allocation4], 0
    // Predicated region
    $region2: #{tpu_custom_call.1} parent=1 // pred_check
      _
    $region3: #{tpu_custom_call.1} parent=1 // pred_check_branch
      %22 = sbr.rel (0) target = $region5
    $region4: #{tpu_custom_call.1} parent=1 // pred_region
      %24 = vsyncadd [#allocation3], 0
      %s25 = sshll.u32 %s0, 4
      %s26 = int_to_ptr.hbm [resolvable:$true] %s25
      %s27 = sshll.u32 [#allocation2], 4
      %s28 = int_to_ptr.vmem [resolvable:$true] %s27
      %33 = dma.hbm_to_vmem [thread:$0]  %s26, 256, %s28, [#allocation3], 128, 128, 8
    $region5: #{tpu_custom_call.1} parent=1 // pred_fallthru
      _
    // Predicated region
    $region6: #{tpu_custom_call.1} parent=1 // pred_check
      _
    $region7: #{tpu_custom_call.1} parent=1 // pred_check_branch
      %35 = sbr.rel (0) target = $region9
    $region8: #{tpu_custom_call.1} parent=1 // pred_region
      %37 = vsyncadd [#allocation6], 0
      %s38 = sshll.u32 %s1, 4
      %s39 = int_to_ptr.hbm [resolvable:$true] %s38
      %s40 = sshll.u32 [#allocation5], 4
      %s41 = int_to_ptr.vmem [resolvable:$true] %s40
      %46 = dma.hbm_to_vmem [thread:$0]  %s39, 1024, %s41, [#allocation6], 64, 64, 4
    $region9: #{tpu_custom_call.1} parent=1 // pred_fallthru
      _
    // Predicated region
    $region10: #{tpu_custom_call.1} parent=1 // pred_check
      _
    $region11: #{tpu_custom_call.1} parent=1 // pred_check_branch
      %48 = sbr.rel (0) target = $region13
    $region12: #{tpu_custom_call.1} parent=1 // pred_region
      _
    $region13: #{tpu_custom_call.1} parent=1 // pred_fallthru
      _
    // Predicated region
    $region14: #{tpu_custom_call.1} parent=1 // pred_check
      _
    $region15: #{tpu_custom_call.1} parent=1 // pred_check_branch
      %50 = sbr.rel (0) target = $region17
    $region16: #{tpu_custom_call.1} parent=1 // pred_region
      %52 = vsyncadd [#allocation6], 0
      %s53 = sshll.u32 %s3, 4
      %s54 = int_to_ptr.hbm [resolvable:$true] %s53
      %s55 = sshll.u32 [#allocation7], 4
      %s56 = int_to_ptr.vmem [resolvable:$true] %s55
      %61 = dma.hbm_to_vmem [thread:$0]  %s54, 1024, %s56, [#allocation6], 64, 64, 4
    $region17: #{tpu_custom_call.1} parent=1 // pred_fallthru
      _
    // Predicated region
    $region18: #{tpu_custom_call.1} parent=1 // pred_check
      _
    $region19: #{tpu_custom_call.1} parent=1 // pred_check_branch
      %63 = sbr.rel (0) target = $region21
    $region20: #{tpu_custom_call.1} parent=1 // pred_region
      %65 = vsyncadd [#allocation9], 0
      %s66 = sshll.u32 %s4, 4
      %s67 = int_to_ptr.hbm [resolvable:$true] %s66
      %s68 = sshll.u32 [#allocation8], 4
      %s69 = int_to_ptr.vmem [resolvable:$true] %s68
      %74 = dma.hbm_to_vmem [thread:$0]  %s67, 1024, %s69, [#allocation9], 64, 64, 4
    $region21: #{tpu_custom_call.1} parent=1 // pred_fallthru
      _
    // Predicated region
    $region22: #{tpu_custom_call.1} parent=1 // pred_check
      _
    $region23: #{tpu_custom_call.1} parent=1 // pred_check_branch
      %76 = sbr.rel (0) target = $region25
    $region24: #{tpu_custom_call.1} parent=1 // pred_region
      _
    $region25: #{tpu_custom_call.1} parent=1 // pred_fallthru
      _
    // Predicated region
    $region26: #{tpu_custom_call.1} parent=1 // pred_check
      _
    $region27: #{tpu_custom_call.1} parent=1 // pred_check_branch
      %78 = sbr.rel (0) target = $region29
    $region28: #{tpu_custom_call.1} parent=1 // pred_region
      _
    $region29: #{tpu_custom_call.1} parent=1 // pred_fallthru
      _
    // Predicated region
    $region30: #{tpu_custom_call.1} parent=1 // pred_check
      _
    $region31: #{tpu_custom_call.1} parent=1 // pred_check_branch
      %80 = sbr.rel (0) target = $region33
    $region32: #{tpu_custom_call.1} parent=1 // pred_region
      %82 = vsyncadd [#allocation9], 0
      %s83 = sshll.u32 %s7, 4
      %s84 = int_to_ptr.hbm [resolvable:$true] %s83
      %s85 = sshll.u32 [#allocation10], 4
      %s86 = int_to_ptr.vmem [resolvable:$true] %s85
      %91 = dma.hbm_to_vmem [thread:$0]  %s84, 1024, %s86, [#allocation9], 64, 64, 4
    $region33: #{tpu_custom_call.1} parent=1 // pred_fallthru
      _
    // Predicated region
    $region34: #{tpu_custom_call.1} parent=1 // pred_check
      _
    $region35: #{tpu_custom_call.1} parent=1 // pred_check_branch
      %93 = sbr.rel (0) target = $region37
    $region36: #{tpu_custom_call.1} parent=1 // pred_region
      _
    $region37: #{tpu_custom_call.1} parent=1 // pred_fallthru
      _
    // Predicated region
    $region38: #{tpu_custom_call.1} parent=1 // pred_check
      _
    $region39: #{tpu_custom_call.1} parent=1 // pred_check_branch
      %95 = sbr.rel (0) target = $region41
    $region40: #{tpu_custom_call.1} parent=1 // pred_region
      %97 = vsyncadd [#allocation12], 0
      %s98 = sshll.u32 %s9, 4
      %s99 = int_to_ptr.hbm [resolvable:$true] %s98
      %s100 = sshll.u32 [#allocation11], 4
      %s101 = int_to_ptr.vmem [resolvable:$true] %s100
      %106 = dma.hbm_to_vmem [thread:$0]  %s99, 1024, %s101, [#allocation12], 64, 64, 4
    $region41: #{tpu_custom_call.1} parent=1 // pred_fallthru
      _
    // Predicated region
    $region42: #{tpu_custom_call.1} parent=1 // pred_check
      _
    $region43: #{tpu_custom_call.1} parent=1 // pred_check_branch
      %108 = sbr.rel (0) target = $region45
    $region44: #{tpu_custom_call.1} parent=1 // pred_region
      _
    $region45: #{tpu_custom_call.1} parent=1 // pred_fallthru
      _
    // Predicated region
    $region46: #{tpu_custom_call.1} parent=1 // pred_check
      _
    $region47: #{tpu_custom_call.1} parent=1 // pred_check_branch
      %110 = sbr.rel (0) target = $region49
    $region48: #{tpu_custom_call.1} parent=1 // pred_region
      %112 = dma.done [#allocation3], 256
    $region49: #{tpu_custom_call.1} parent=1 // pred_fallthru
      _
    // Predicated region
    $region50: #{tpu_custom_call.1} parent=1 // pred_check
      _
    $region51: #{tpu_custom_call.1} parent=1 // pred_check_branch
      %114 = sbr.rel (0) target = $region53
    $region52: #{tpu_custom_call.1} parent=1 // pred_region
      %116 = dma.done [#allocation6], 1024
    $region53: #{tpu_custom_call.1} parent=1 // pred_fallthru
      _
    // Predicated region
    $region54: #{tpu_custom_call.1} parent=1 // pred_check
      _
    $region55: #{tpu_custom_call.1} parent=1 // pred_check_branch
      %118 = sbr.rel (0) target = $region57
    $region56: #{tpu_custom_call.1} parent=1 // pred_region
      %120 = dma.done [#allocation6], 1024
    $region57: #{tpu_custom_call.1} parent=1 // pred_fallthru
      _
    // Predicated region
    $region58: #{tpu_custom_call.1} parent=1 // pred_check
      _
    $region59: #{tpu_custom_call.1} parent=1 // pred_check_branch
      %122 = sbr.rel (0) target = $region61
    $region60: #{tpu_custom_call.1} parent=1 // pred_region
      %124 = dma.done [#allocation9], 1024
    $region61: #{tpu_custom_call.1} parent=1 // pred_fallthru
      _
    // Predicated region
    $region62: #{tpu_custom_call.1} parent=1 // pred_check
      _
    $region63: #{tpu_custom_call.1} parent=1 // pred_check_branch
      %126 = sbr.rel (0) target = $region65
    $region64: #{tpu_custom_call.1} parent=1 // pred_region
      %128 = dma.done [#allocation9], 1024
    $region65: #{tpu_custom_call.1} parent=1 // pred_fallthru
      _
    // Predicated region
    $region66: #{tpu_custom_call.1} parent=1 // pred_check
      _
    $region67: #{tpu_custom_call.1} parent=1 // pred_check_branch
      %130 = sbr.rel (0) target = $region69
    $region68: #{tpu_custom_call.1} parent=1 // pred_region
      %132 = dma.done [#allocation12], 1024
    $region69: #{tpu_custom_call.1} parent=1 // pred_fallthru
      _
    %v133 = vld [vmem:[#allocation2] sm:$0xff]
    %v134 = vld [vmem:[#allocation2 + $0x8] sm:$0xff]
    %v135 = vpack.c.bf16 %v134, %v133
    %v136 = vld [vmem:[#allocation5] sm:$0xf]
    %v137 = vld [vmem:[#allocation5 + $0x4] sm:$0xf]
    %v138 = vld [vmem:[#allocation5 + $0x8] sm:$0xf]
    %v139 = vld [vmem:[#allocation5 + $0xc] sm:$0xf]
    %v140 = vld [vmem:[#allocation5 + $0x10] sm:$0xf]
    %v141 = vld [vmem:[#allocation5 + $0x14] sm:$0xf]
    %v142 = vld [vmem:[#allocation5 + $0x18] sm:$0xf]
    %v143 = vld [vmem:[#allocation5 + $0x1c] sm:$0xf]
    %v144 = vld [vmem:[#allocation5 + $0x20] sm:$0xf]
    %v145 = vld [vmem:[#allocation5 + $0x24] sm:$0xf]
    %v146 = vld [vmem:[#allocation5 + $0x28] sm:$0xf]
    %v147 = vld [vmem:[#allocation5 + $0x2c] sm:$0xf]
    %v148 = vld [vmem:[#allocation5 + $0x30] sm:$0xf]
    %v149 = vld [vmem:[#allocation5 + $0x34] sm:$0xf]
    %v150 = vld [vmem:[#allocation5 + $0x38] sm:$0xf]
    %v151 = vld [vmem:[#allocation5 + $0x3c] sm:$0xf]
    %v152 = vld [vmem:[%s2] sm:$0x1]
    %v154 = vperm.slane %v152, 0
    %v172 = vunpack.c.l.b16 %v136
    %v173 = vunpack.c.l.b16 %v137
    %v174 = vunpack.c.l.b16 %v138
    %v175 = vunpack.c.l.b16 %v139
    %v176 = vunpack.c.l.b16 %v140
    %v177 = vunpack.c.l.b16 %v141
    %v178 = vunpack.c.l.b16 %v142
    %v179 = vunpack.c.l.b16 %v143
    %v180 = vunpack.c.l.b16 %v144
    %v181 = vunpack.c.l.b16 %v145
    %v182 = vunpack.c.l.b16 %v146
    %v183 = vunpack.c.l.b16 %v147
    %v184 = vunpack.c.l.b16 %v148
    %v185 = vunpack.c.l.b16 %v149
    %v186 = vunpack.c.l.b16 %v150
    %v187 = vunpack.c.l.b16 %v151
    %v188 = vpack.c.b16 %v173, %v172
    %v189 = vpack.c.b16 %v175, %v174
    %v190 = vpack.c.b16 %v177, %v176
    %v191 = vpack.c.b16 %v179, %v178
    %v192 = vpack.c.b16 %v181, %v180
    %v193 = vpack.c.b16 %v183, %v182
    %v194 = vpack.c.b16 %v185, %v184
    %v195 = vpack.c.b16 %v187, %v186
    %204 = vmatpush.bf16.msra.mxu0 %v195
    %205 = vmatpush.bf16.msra.mxu0 %v194
    %206 = vmatpush.bf16.msra.mxu0 %v193
    %207 = vmatpush.bf16.msra.mxu0 %v192
    %208 = vmatpush.bf16.msra.mxu0 %v191
    %209 = vmatpush.bf16.msra.mxu0 %v190
    %210 = vmatpush.bf16.msra.mxu0 %v189
    %211 = vmatpush.bf16.msra.mxu0 %v188
    %212 = vmatmul.bf16.gmra.mxu0 %v135
    %v213 = vpop.f32.mrf.mxu0
    %v214 = vadd.f32 %v154, %v213
    %v215 = vpop.f32.mrf.mxu0
    %v216 = vadd.f32 %v154, %v215
    %217 = vdwg.mxu0
    %v218 = vmax.f32 %v214, 0.0
    %v219 = vmax.f32 %v216, 0.0
    %v220 = vpack.c.bf16 %v219, %v218
    %v221 = vld [vmem:[#allocation7] sm:$0xf]
    %v222 = vld [vmem:[#allocation7 + $0x4] sm:$0xf]
    %v223 = vld [vmem:[#allocation7 + $0x8] sm:$0xf]
    %v224 = vld [vmem:[#allocation7 + $0xc] sm:$0xf]
    %v225 = vld [vmem:[#allocation7 + $0x10] sm:$0xf]
    %v226 = vld [vmem:[#allocation7 + $0x14] sm:$0xf]
    %v227 = vld [vmem:[#allocation7 + $0x18] sm:$0xf]
    %v228 = vld [vmem:[#allocation7 + $0x1c] sm:$0xf]
    %v229 = vld [vmem:[#allocation7 + $0x20] sm:$0xf]
    %v230 = vld [vmem:[#allocation7 + $0x24] sm:$0xf]
    %v231 = vld [vmem:[#allocation7 + $0x28] sm:$0xf]
    %v232 = vld [vmem:[#allocation7 + $0x2c] sm:$0xf]
    %v233 = vld [vmem:[#allocation7 + $0x30] sm:$0xf]
    %v234 = vld [vmem:[#allocation7 + $0x34] sm:$0xf]
    %v235 = vld [vmem:[#allocation7 + $0x38] sm:$0xf]
    %v236 = vld [vmem:[#allocation7 + $0x3c] sm:$0xf]
    %v237 = vld [vmem:[%s5] sm:$0x1]
    %v239 = vperm.slane %v237, 0
    %v257 = vunpack.c.l.b16 %v221
    %v258 = vunpack.c.l.b16 %v222
    %v259 = vunpack.c.l.b16 %v223
    %v260 = vunpack.c.l.b16 %v224
    %v261 = vunpack.c.l.b16 %v225
    %v262 = vunpack.c.l.b16 %v226
    %v263 = vunpack.c.l.b16 %v227
    %v264 = vunpack.c.l.b16 %v228
    %v265 = vunpack.c.l.b16 %v229
    %v266 = vunpack.c.l.b16 %v230
    %v267 = vunpack.c.l.b16 %v231
    %v268 = vunpack.c.l.b16 %v232
    %v269 = vunpack.c.l.b16 %v233
    %v270 = vunpack.c.l.b16 %v234
    %v271 = vunpack.c.l.b16 %v235
    %v272 = vunpack.c.l.b16 %v236
    %v273 = vpack.c.b16 %v258, %v257
    %v274 = vpack.c.b16 %v260, %v259
    %v275 = vpack.c.b16 %v262, %v261
    %v276 = vpack.c.b16 %v264, %v263
    %v277 = vpack.c.b16 %v266, %v265
    %v278 = vpack.c.b16 %v268, %v267
    %v279 = vpack.c.b16 %v270, %v269
    %v280 = vpack.c.b16 %v272, %v271
    %289 = vmatpush.bf16.msra.mxu0 %v280
    %290 = vmatpush.bf16.msra.mxu0 %v279
    %291 = vmatpush.bf16.msra.mxu0 %v278
    %292 = vmatpush.bf16.msra.mxu0 %v277
    %293 = vmatpush.bf16.msra.mxu0 %v276
    %294 = vmatpush.bf16.msra.mxu0 %v275
    %295 = vmatpush.bf16.msra.mxu0 %v274
    %296 = vmatpush.bf16.msra.mxu0 %v273
    %297 = vmatmul.bf16.gmra.mxu0 %v220
    %v298 = vpop.f32.mrf.mxu0
    %v299 = vadd.f32 %v239, %v298
    %v300 = vpop.f32.mrf.mxu0
    %v301 = vadd.f32 %v239, %v300
    %302 = vdwg.mxu0
    %v303 = vmax.f32 %v299, 0.0
    %v304 = vmax.f32 %v301, 0.0
    %v305 = vpack.c.bf16 %v304, %v303
    %v306 = vld [vmem:[#allocation8] sm:$0xf]
    %v307 = vld [vmem:[#allocation8 + $0x4] sm:$0xf]
    %v308 = vld [vmem:[#allocation8 + $0x8] sm:$0xf]
    %v309 = vld [vmem:[#allocation8 + $0xc] sm:$0xf]
    %v310 = vld [vmem:[#allocation8 + $0x10] sm:$0xf]
    %v311 = vld [vmem:[#allocation8 + $0x14] sm:$0xf]
    %v312 = vld [vmem:[#allocation8 + $0x18] sm:$0xf]
    %v313 = vld [vmem:[#allocation8 + $0x1c] sm:$0xf]
    %v314 = vld [vmem:[#allocation8 + $0x20] sm:$0xf]
    %v315 = vld [vmem:[#allocation8 + $0x24] sm:$0xf]
    %v316 = vld [vmem:[#allocation8 + $0x28] sm:$0xf]
    %v317 = vld [vmem:[#allocation8 + $0x2c] sm:$0xf]
    %v318 = vld [vmem:[#allocation8 + $0x30] sm:$0xf]
    %v319 = vld [vmem:[#allocation8 + $0x34] sm:$0xf]
    %v320 = vld [vmem:[#allocation8 + $0x38] sm:$0xf]
    %v321 = vld [vmem:[#allocation8 + $0x3c] sm:$0xf]
    %v322 = vld [vmem:[%s6] sm:$0x1]
    %v324 = vperm.slane %v322, 0
    %v342 = vunpack.c.l.b16 %v306
    %v343 = vunpack.c.l.b16 %v307
    %v344 = vunpack.c.l.b16 %v308
    %v345 = vunpack.c.l.b16 %v309
    %v346 = vunpack.c.l.b16 %v310
    %v347 = vunpack.c.l.b16 %v311
    %v348 = vunpack.c.l.b16 %v312
    %v349 = vunpack.c.l.b16 %v313
    %v350 = vunpack.c.l.b16 %v314
    %v351 = vunpack.c.l.b16 %v315
    %v352 = vunpack.c.l.b16 %v316
    %v353 = vunpack.c.l.b16 %v317
    %v354 = vunpack.c.l.b16 %v318
    %v355 = vunpack.c.l.b16 %v319
    %v356 = vunpack.c.l.b16 %v320
    %v357 = vunpack.c.l.b16 %v321
    %v358 = vpack.c.b16 %v343, %v342
    %v359 = vpack.c.b16 %v345, %v344
    %v360 = vpack.c.b16 %v347, %v346
    %v361 = vpack.c.b16 %v349, %v348
    %v362 = vpack.c.b16 %v351, %v350
    %v363 = vpack.c.b16 %v353, %v352
    %v364 = vpack.c.b16 %v355, %v354
    %v365 = vpack.c.b16 %v357, %v356
    %374 = vmatpush.bf16.msra.mxu0 %v365
    %375 = vmatpush.bf16.msra.mxu0 %v364
    %376 = vmatpush.bf16.msra.mxu0 %v363
    %377 = vmatpush.bf16.msra.mxu0 %v362
    %378 = vmatpush.bf16.msra.mxu0 %v361
    %379 = vmatpush.bf16.msra.mxu0 %v360
    %380 = vmatpush.bf16.msra.mxu0 %v359
    %381 = vmatpush.bf16.msra.mxu0 %v358
    %382 = vmatmul.bf16.gmra.mxu0 %v305
    %v383 = vpop.f32.mrf.mxu0
    %v384 = vadd.f32 %v324, %v383
    %v385 = vpop.f32.mrf.mxu0
    %v386 = vadd.f32 %v324, %v385
    %387 = vdwg.mxu0
    %v388 = vmax.f32 %v384, 0.0
    %v389 = vmax.f32 %v386, 0.0
    %v390 = vpack.c.bf16 %v389, %v388
    %v391 = vld [vmem:[#allocation10] sm:$0xf]
    %v392 = vld [vmem:[#allocation10 + $0x4] sm:$0xf]
    %v393 = vld [vmem:[#allocation10 + $0x8] sm:$0xf]
    %v394 = vld [vmem:[#allocation10 + $0xc] sm:$0xf]
    %v395 = vld [vmem:[#allocation10 + $0x10] sm:$0xf]
    %v396 = vld [vmem:[#allocation10 + $0x14] sm:$0xf]
    %v397 = vld [vmem:[#allocation10 + $0x18] sm:$0xf]
    %v398 = vld [vmem:[#allocation10 + $0x1c] sm:$0xf]
    %v399 = vld [vmem:[#allocation10 + $0x20] sm:$0xf]
    %v400 = vld [vmem:[#allocation10 + $0x24] sm:$0xf]
    %v401 = vld [vmem:[#allocation10 + $0x28] sm:$0xf]
    %v402 = vld [vmem:[#allocation10 + $0x2c] sm:$0xf]
    %v403 = vld [vmem:[#allocation10 + $0x30] sm:$0xf]
    %v404 = vld [vmem:[#allocation10 + $0x34] sm:$0xf]
    %v405 = vld [vmem:[#allocation10 + $0x38] sm:$0xf]
    %v406 = vld [vmem:[#allocation10 + $0x3c] sm:$0xf]
    %v407 = vld [vmem:[%s8] sm:$0x1]
    %v409 = vperm.slane %v407, 0
    %v427 = vunpack.c.l.b16 %v391
    %v428 = vunpack.c.l.b16 %v392
    %v429 = vunpack.c.l.b16 %v393
    %v430 = vunpack.c.l.b16 %v394
    %v431 = vunpack.c.l.b16 %v395
    %v432 = vunpack.c.l.b16 %v396
    %v433 = vunpack.c.l.b16 %v397
    %v434 = vunpack.c.l.b16 %v398
    %v435 = vunpack.c.l.b16 %v399
    %v436 = vunpack.c.l.b16 %v400
    %v437 = vunpack.c.l.b16 %v401
    %v438 = vunpack.c.l.b16 %v402
    %v439 = vunpack.c.l.b16 %v403
    %v440 = vunpack.c.l.b16 %v404
    %v441 = vunpack.c.l.b16 %v405
    %v442 = vunpack.c.l.b16 %v406
    %v443 = vpack.c.b16 %v428, %v427
    %v444 = vpack.c.b16 %v430, %v429
    %v445 = vpack.c.b16 %v432, %v431
    %v446 = vpack.c.b16 %v434, %v433
    %v447 = vpack.c.b16 %v436, %v435
    %v448 = vpack.c.b16 %v438, %v437
    %v449 = vpack.c.b16 %v440, %v439
    %v450 = vpack.c.b16 %v442, %v441
    %459 = vmatpush.bf16.msra.mxu0 %v450
    %460 = vmatpush.bf16.msra.mxu0 %v449
    %461 = vmatpush.bf16.msra.mxu0 %v448
    %462 = vmatpush.bf16.msra.mxu0 %v447
    %463 = vmatpush.bf16.msra.mxu0 %v446
    %464 = vmatpush.bf16.msra.mxu0 %v445
    %465 = vmatpush.bf16.msra.mxu0 %v444
    %466 = vmatpush.bf16.msra.mxu0 %v443
    %467 = vmatmul.bf16.gmra.mxu0 %v390
    %v468 = vpop.f32.mrf.mxu0
    %v469 = vadd.f32 %v409, %v468
    %v470 = vpop.f32.mrf.mxu0
    %v471 = vadd.f32 %v409, %v470
    %472 = vdwg.mxu0
    %v473 = vld [vmem:[#allocation11] sm:$0xf]
    %v474 = vld [vmem:[#allocation11 + $0x4] sm:$0xf]
    %v475 = vld [vmem:[#allocation11 + $0x8] sm:$0xf]
    %v476 = vld [vmem:[#allocation11 + $0xc] sm:$0xf]
    %v477 = vld [vmem:[#allocation11 + $0x10] sm:$0xf]
    %v478 = vld [vmem:[#allocation11 + $0x14] sm:$0xf]
    %v479 = vld [vmem:[#allocation11 + $0x18] sm:$0xf]
    %v480 = vld [vmem:[#allocation11 + $0x1c] sm:$0xf]
    %v481 = vld [vmem:[#allocation11 + $0x20] sm:$0xf]
    %v482 = vld [vmem:[#allocation11 + $0x24] sm:$0xf]
    %v483 = vld [vmem:[#allocation11 + $0x28] sm:$0xf]
    %v484 = vld [vmem:[#allocation11 + $0x2c] sm:$0xf]
    %v485 = vld [vmem:[#allocation11 + $0x30] sm:$0xf]
    %v486 = vld [vmem:[#allocation11 + $0x34] sm:$0xf]
    %v487 = vld [vmem:[#allocation11 + $0x38] sm:$0xf]
    %v488 = vld [vmem:[#allocation11 + $0x3c] sm:$0xf]
    %v489 = vld [vmem:[%s10] sm:$0x1]
    %v491 = vperm.slane %v489, 0
    %v509 = vunpack.c.l.b16 %v473
    %v510 = vunpack.c.l.b16 %v474
    %v511 = vunpack.c.l.b16 %v475
    %v512 = vunpack.c.l.b16 %v476
    %v513 = vunpack.c.l.b16 %v477
    %v514 = vunpack.c.l.b16 %v478
    %v515 = vunpack.c.l.b16 %v479
    %v516 = vunpack.c.l.b16 %v480
    %v517 = vunpack.c.l.b16 %v481
    %v518 = vunpack.c.l.b16 %v482
    %v519 = vunpack.c.l.b16 %v483
    %v520 = vunpack.c.l.b16 %v484
    %v521 = vunpack.c.l.b16 %v485
    %v522 = vunpack.c.l.b16 %v486
    %v523 = vunpack.c.l.b16 %v487
    %v524 = vunpack.c.l.b16 %v488
    %v525 = vpack.c.b16 %v510, %v509
    %v526 = vpack.c.b16 %v512, %v511
    %v527 = vpack.c.b16 %v514, %v513
    %v528 = vpack.c.b16 %v516, %v515
    %v529 = vpack.c.b16 %v518, %v517
    %v530 = vpack.c.b16 %v520, %v519
    %v531 = vpack.c.b16 %v522, %v521
    %v532 = vpack.c.b16 %v524, %v523
    %541 = vmatpush.bf16.msra.mxu0 %v532
    %542 = vmatpush.bf16.msra.mxu0 %v531
    %543 = vmatpush.bf16.msra.mxu0 %v530
    %544 = vmatpush.bf16.msra.mxu0 %v529
    %545 = vmatpush.bf16.msra.mxu0 %v528
    %546 = vmatpush.bf16.msra.mxu0 %v527
    %547 = vmatpush.bf16.msra.mxu0 %v526
    %548 = vmatpush.bf16.msra.mxu0 %v525
    %549 = vmatmul.bf16.gmra.mxu0 %v390
    %v550 = vpop.f32.mrf.mxu0
    %v551 = vadd.f32 %v491, %v550
    %v552 = vpop.f32.mrf.mxu0
    %v553 = vadd.f32 %v491, %v552
    %554 = vdwg.mxu0
    %v555 = vsub.f32 %v133, %v469
    %v556 = vsub.f32 %v134, %v471
    %v557 = vsub.f32 0.0, %v551
    %v558 = vsub.f32 0.0, %v553
    %v559 = vmul.f32 %v557, 1.442695
    %v560 = vpow.pop %v559
    %v561 = vmul.f32 %v558, 1.442695
    %v562 = vpow.pop %v561
    %v563 = vmul.f32 %v555, %v560
    %v564 = vmul.f32 %v556, %v562
    %565 = vst [vmem:[#allocation13] sm:$0xff] %v563
    %566 = vst [vmem:[#allocation13 + $0x8] sm:$0xff] %v564
    %s567 = scalar_lea.vmem [#allocation13], 16
    %568 = vst [vmem:[%s567] sm:$0xff] %v557
    %569 = vst [vmem:[%s567 + $0x8] sm:$0xff] %v558
    // Predicated region
    $region70: #{tpu_custom_call.1} parent=1 // pred_check
      _
    $region71: #{tpu_custom_call.1} parent=1 // pred_check_branch
      %571 = sbr.rel (0) target = $region73
    $region72: #{tpu_custom_call.1} parent=1 // pred_region
      %573 = vsyncadd [#allocation4], 0
      %s574 = sshll.u32 [#allocation13], 4
      %s575 = int_to_ptr.vmem [resolvable:$true] %s574
      %s576 = sshll.u32 %s11, 4
      %s577 = int_to_ptr.hbm [resolvable:$true] %s576
      %582 = dma.vmem_to_hbm [thread:$0]  %s575, 512, %s577, [#allocation4], 128, 128, 8
    $region73: #{tpu_custom_call.1} parent=1 // pred_fallthru
      _
    // Predicated region
    $region74: #{tpu_custom_call.1} parent=1 // pred_check
      _
    $region75: #{tpu_custom_call.1} parent=1 // pred_check_branch
      %584 = sbr.rel (0) target = $region77
    $region76: #{tpu_custom_call.1} parent=1 // pred_region
      %586 = dma.done [#allocation4], 512
    $region77: #{tpu_custom_call.1} parent=1 // pred_fallthru
      _
    %587 = vsyncpa [#allocation3], 1
    %588 = vsyncpa [#allocation6], 1
    %589 = vsyncpa [#allocation9], 1
    %590 = vsyncpa [#allocation12], 1
    %591 = vsyncpa [#allocation4], 1

</llo_original>
